<compile_context>
chip_gen: v7x
topology: tpu7x:2x2x1
jax: 0.10.0
libtpu: 0.0.40
codegen_flags: <defaults>
</compile_context>

<pallas_src>
import functools

import jax
import jax.numpy as jnp
from jax import lax
from jax.experimental import pallas as pl
from jax.experimental.pallas import tpu as pltpu

# ----- model hyper-params (from the PyTorch module __init__) -----
NUM_FEAT = 2      # input_size
HIDDEN = 10       # hidden_size (module default)
OUT = 1           # output_size
NUM_LAYERS = 1
NUM_BATCH = 1

# padded sizes used inside the kernel
F_PAD = 8         # contracting dim of input projection (sublane axis -> multiple of 8)
H_PAD = 128       # hidden channels on the lane axis
O_PAD = 128       # output channels on the lane axis (lane-dense store)
MAX_CHUNK = 512   # time-chunk size for the pipelined grid (VMEM ~1 MiB/chunk)


def _round_up(x, m):
    return ((x + m - 1) // m) * m


def _rnn_kernel(x_ref, wih_ref, whh_ref, b_ref, wout_ref, bout_ref,
                y_ref, hn_ref,
                pre_all, h_all,
                *, seq_len, chunk):
    """One time-chunk of the Elman-RNN (relu) + output linear layer.

    x_ref    : (chunk, F_PAD)     zero-padded inputs for this chunk
    wih_ref  : (F_PAD, H_PAD)     W_ih^T  (zero-padded)
    whh_ref  : (H_PAD, H_PAD)     W_hh^T  (zero-padded)
    b_ref    : (1, H_PAD)         b_ih + b_hh
    wout_ref : (H_PAD, O_PAD)     W_out^T (zero-padded)
    bout_ref : (1, O_PAD)         b_out
    y_ref    : (chunk, O_PAD)     per-step outputs (lane 0 meaningful)
    hn_ref   : (1, H_PAD)         hidden state; VMEM-resident across the grid (carry)
    pre_all  : (chunk, H_PAD)     hoisted input projection for this chunk
    h_all    : (chunk, H_PAD)     per-step hidden states of this chunk
    """
    c = pl.program_id(0)

    @pl.when(c == 0)
    def _init():
        hn_ref[...] = jnp.zeros_like(hn_ref)

    # Steps of this chunk that belong to the real (un-padded) sequence.
    remaining = jnp.int32(seq_len) - c * chunk

    # Loop-invariant weight load hoisted OFF the serial h->h chain (one vld burst).
    whh = whh_ref[...]

    # --- hoisted input projection for the whole chunk (one lane-dense MXU matmul) ---
    pre_all[...] = (
        jnp.dot(x_ref[...], wih_ref[...], preferred_element_type=jnp.float32)
        + b_ref[...])

    num_blocks = chunk // 8
    h0 = hn_ref[...]                                   # (1, H_PAD) carried-in hidden

    # --- fast path: every step of this chunk is real (all chunks but maybe the last) ---
    @pl.when(remaining >= chunk)
    def _fast():
        def block(j, h):
            base = pl.multiple_of(j * 8, 8)
            pre_blk = pre_all[pl.ds(base, 8), :]       # one aligned (8,128) load
            rows = []
            for r in range(8):                         # fully unrolled
                h = jnp.maximum(
                    pre_blk[r:r + 1, :]
                    + jnp.dot(h, whh, preferred_element_type=jnp.float32),
                    0.0)
                rows.append(h)
            # one aligned (8,128) store per block
            h_all[pl.ds(base, 8), :] = jnp.concatenate(rows, axis=0)
            return h

        hn_ref[...] = lax.fori_loop(0, num_blocks, block, h0)

    # --- tail path: final padded chunk; padded steps are no-ops so h_T stays exact ---
    @pl.when(remaining < chunk)
    def _tail():
        def block(j, h):
            base = pl.multiple_of(j * 8, 8)
            pre_blk = pre_all[pl.ds(base, 8), :]
            rows = []
            for r in range(8):
                h_cand = jnp.maximum(
                    pre_blk[r:r + 1, :]
                    + jnp.dot(h, whh, preferred_element_type=jnp.float32),
                    0.0)
                h = jnp.where(base + r < remaining, h_cand, h)
                rows.append(h)
            h_all[pl.ds(base, 8), :] = jnp.concatenate(rows, axis=0)
            return h

        hn_ref[...] = lax.fori_loop(0, num_blocks, block, h0)

    # --- hoisted output projection: one matmul + one unmasked lane-dense store ---
    y_ref[...] = (
        jnp.dot(h_all[...], wout_ref[...], preferred_element_type=jnp.float32)
        + bout_ref[...])


@functools.partial(jax.jit, static_argnames=("max_chunk",))
def two_feature_rnn_forward(inputs, params, max_chunk=MAX_CHUNK):
    """inputs: (T, 1, NUM_FEAT) float32.  Returns (out (T,1,1), hn (1,1,HIDDEN))."""
    w_ih, w_hh, b_ih, b_hh, w_out, b_out = (
        params["w_ih"], params["w_hh"], params["b_ih"], params["b_hh"],
        params["w_out"], params["b_out"])
    T = inputs.shape[0]

    chunk = min(max_chunk, _round_up(T, 8))
    T_pad = _round_up(T, chunk)
    num_chunks = T_pad // chunk

    # ----- glue: pad to TPU-friendly slabs (plain JAX, jnp.pad) -----
    x = inputs[:, 0, :].astype(jnp.float32)                               # (T, F)
    x_p = jnp.pad(x, ((0, T_pad - T), (0, F_PAD - NUM_FEAT)))
    wih_p = jnp.pad(w_ih.T.astype(jnp.float32),
                    ((0, F_PAD - NUM_FEAT), (0, H_PAD - HIDDEN)))
    whh_p = jnp.pad(w_hh.T.astype(jnp.float32),
                    ((0, H_PAD - HIDDEN), (0, H_PAD - HIDDEN)))
    b_p = jnp.pad((b_ih + b_hh).astype(jnp.float32),
                  (0, H_PAD - HIDDEN)).reshape(1, H_PAD)
    wout_p = jnp.pad(w_out.T.astype(jnp.float32),
                     ((0, H_PAD - HIDDEN), (0, O_PAD - OUT)))
    bout_p = jnp.pad(b_out.astype(jnp.float32),
                     (0, O_PAD - OUT)).reshape(1, O_PAD)

    kernel = functools.partial(_rnn_kernel, seq_len=T, chunk=chunk)

    y_pad, hn_pad = pl.pallas_call(
        kernel,
        out_shape=(jax.ShapeDtypeStruct((T_pad, O_PAD), jnp.float32),
                   jax.ShapeDtypeStruct((1, H_PAD), jnp.float32)),
        grid=(num_chunks,),
        in_specs=[
            pl.BlockSpec((chunk, F_PAD), lambda c: (c, 0)),   # x chunk
            pl.BlockSpec((F_PAD, H_PAD), lambda c: (0, 0)),   # W_ih^T
            pl.BlockSpec((H_PAD, H_PAD), lambda c: (0, 0)),   # W_hh^T
            pl.BlockSpec((1, H_PAD), lambda c: (0, 0)),       # b_ih + b_hh
            pl.BlockSpec((H_PAD, O_PAD), lambda c: (0, 0)),   # W_out^T
            pl.BlockSpec((1, O_PAD), lambda c: (0, 0)),       # b_out
        ],
        out_specs=(
            pl.BlockSpec((chunk, O_PAD), lambda c: (c, 0)),   # y chunk
            pl.BlockSpec((1, H_PAD), lambda c: (0, 0)),       # h carry / h_T (resident)
        ),
        scratch_shapes=[
            pltpu.VMEM((chunk, H_PAD), jnp.float32),          # hoisted input projection
            pltpu.VMEM((chunk, H_PAD), jnp.float32),          # per-step hidden states
        ],
        compiler_params=pltpu.CompilerParams(
            dimension_semantics=("arbitrary",)),              # serial recurrence axis
    )(x_p, wih_p, whh_p, b_p, wout_p, bout_p)

    out = y_pad[:T, :OUT].reshape(T, NUM_BATCH, OUT)
    hn = hn_pad[:, :HIDDEN].reshape(NUM_LAYERS, NUM_BATCH, HIDDEN)
    return out, hn


def _reference_forward(inputs, params):
    """Pure-JAX reference of the PyTorch forward pass (for validation)."""
    w_ih, w_hh, b_ih, b_hh, w_out, b_out = (
        params["w_ih"], params["w_hh"], params["b_ih"], params["b_hh"],
        params["w_out"], params["b_out"])
    x = inputs[:, 0, :]                                                   # (T, F)

    def step(h, x_t):
        h_new = jax.nn.relu(x_t @ w_ih.T + b_ih + h @ w_hh.T + b_hh)
        return h_new, h_new

    h0 = jnp.zeros((HIDDEN,), jnp.float32)
    h_final, hs = lax.scan(step, h0, x)
    y = hs @ w_out.T + b_out                                              # (T, 1)
    return y.reshape(-1, 1, 1), h_final.reshape(1, 1, HIDDEN)


def init_params(key):
    """Deterministic init mirroring PyTorch shapes (uniform +/- 1/sqrt(H))."""
    ks = jax.random.split(key, 6)
    bound = 1.0 / jnp.sqrt(jnp.float32(HIDDEN))

    def u(k, shape):
        return jax.random.uniform(k, shape, jnp.float32, -bound, bound)

    return {
        "w_ih": u(ks[0], (HIDDEN, NUM_FEAT)),   # rnn.weight_ih_l0
        "w_hh": u(ks[1], (HIDDEN, HIDDEN)),     # rnn.weight_hh_l0
        "b_ih": u(ks[2], (HIDDEN,)),            # rnn.bias_ih_l0
        "b_hh": u(ks[3], (HIDDEN,)),            # rnn.bias_hh_l0
        "w_out": u(ks[4], (OUT, HIDDEN)),       # out_layer.weight
        "b_out": u(ks[5], (OUT,)),              # out_layer.bias
    }


if __name__ == "__main__":
    key = jax.random.PRNGKey(0)
    k_param, k_x1, k_x2, k_x3 = jax.random.split(key, 4)
    params = init_params(k_param)

    # Case 1: tiny sequence, single chunk, fast path only.
    T1 = 8
    inputs1 = jax.random.normal(k_x1, (T1, NUM_BATCH, NUM_FEAT), jnp.float32)
    out1, hn1 = jax.block_until_ready(two_feature_rnn_forward(inputs1, params))
    ref_out1, ref_hn1 = _reference_forward(inputs1, params)
    assert out1.shape == (T1, NUM_BATCH, OUT) and hn1.shape == (NUM_LAYERS, NUM_BATCH, HIDDEN)
    assert jnp.allclose(out1, ref_out1, atol=2e-5, rtol=1e-4)
    assert jnp.allclose(hn1, ref_hn1, atol=2e-5, rtol=1e-4)

    # Case 2: multi-chunk grid with a padded final chunk (exercises the resident
    # hn_ref carry, the fast path, and the masked tail path).
    T2 = 40
    inputs2 = jax.random.normal(k_x2, (T2, NUM_BATCH, NUM_FEAT), jnp.float32)
    out2, hn2 = jax.block_until_ready(
        two_feature_rnn_forward(inputs2, params, max_chunk=16))
    ref_out2, ref_hn2 = _reference_forward(inputs2, params)
    assert out2.shape == (T2, NUM_BATCH, OUT) and hn2.shape == (NUM_LAYERS, NUM_BATCH, HIDDEN)
    assert jnp.allclose(out2, ref_out2, atol=2e-5, rtol=1e-4)
    assert jnp.allclose(hn2, ref_hn2, atol=2e-5, rtol=1e-4)

    # Case 3: T not a multiple of 8, single padded chunk (tail path only).
    T3 = 13
    inputs3 = jax.random.normal(k_x3, (T3, NUM_BATCH, NUM_FEAT), jnp.float32)
    out3, hn3 = jax.block_until_ready(two_feature_rnn_forward(inputs3, params))
    ref_out3, ref_hn3 = _reference_forward(inputs3, params)
    assert out3.shape == (T3, NUM_BATCH, OUT) and hn3.shape == (NUM_LAYERS, NUM_BATCH, HIDDEN)
    assert jnp.allclose(out3, ref_out3, atol=2e-5, rtol=1e-4)
    assert jnp.allclose(hn3, ref_hn3, atol=2e-5, rtol=1e-4)

    print("KERNEL_OK")
</pallas_src>

<mosaic_0001>
module attributes {stable_mosaic.version = 11 : i64} {
  func.func @_rnn_kernel(%arg0: i32, %arg1: memref<8x8xf32, #tpu.memory_space<vmem>>, %arg2: memref<8x128xf32, #tpu.memory_space<vmem>>, %arg3: memref<128x128xf32, #tpu.memory_space<vmem>>, %arg4: memref<1x128xf32, #tpu.memory_space<vmem>>, %arg5: memref<128x128xf32, #tpu.memory_space<vmem>>, %arg6: memref<1x128xf32, #tpu.memory_space<vmem>>, %arg7: memref<8x128xf32, #tpu.memory_space<vmem>>, %arg8: memref<1x128xf32, #tpu.memory_space<vmem>>, %arg9: memref<8x128xf32, #tpu.memory_space<vmem>>, %arg10: memref<8x128xf32, #tpu.memory_space<vmem>>) attributes {dimension_semantics = [#tpu.dimension_semantics<arbitrary>], iteration_bounds = array<i64: 1>, scalar_prefetch = 0 : i64, scratch_operands = 2 : i64, tpu.core_type = #tpu.core_type<tc>, window_params = [{transform_indices = @transform_0, window_bounds = array<i64: 8, 8>}, {pipeline_mode = #tpu.pipeline_mode<synchronous>, transform_indices = @transform_1, window_bounds = array<i64: 8, 128>}, {pipeline_mode = #tpu.pipeline_mode<synchronous>, transform_indices = @transform_2, window_bounds = array<i64: 128, 128>}, {pipeline_mode = #tpu.pipeline_mode<synchronous>, transform_indices = @transform_3, window_bounds = array<i64: 1, 128>}, {pipeline_mode = #tpu.pipeline_mode<synchronous>, transform_indices = @transform_4, window_bounds = array<i64: 128, 128>}, {pipeline_mode = #tpu.pipeline_mode<synchronous>, transform_indices = @transform_5, window_bounds = array<i64: 1, 128>}, {transform_indices = @transform_6, window_bounds = array<i64: 8, 128>}, {pipeline_mode = #tpu.pipeline_mode<synchronous>, transform_indices = @transform_7, window_bounds = array<i64: 1, 128>}]} {
    %c0_i32 = arith.constant 0 : i32
    %0 = arith.cmpi eq, %arg0, %c0_i32 : i32
    %1 = arith.extui %0 : i1 to i32
    %c0_i32_0 = arith.constant 0 : i32
    %2 = arith.cmpi ne, %1, %c0_i32_0 : i32
    scf.if %2 {
      %cst_26 = arith.constant 0.000000e+00 : f32
      %27 = vector.broadcast %cst_26 : f32 to vector<1x128xf32>
      %c0_27 = arith.constant 0 : index
      %c0_28 = arith.constant 0 : index
      %28 = vector.load %arg8[%c0_27, %c0_28] : memref<1x128xf32, #tpu.memory_space<vmem>>, vector<1x128xf32>
      tpu.vector_store %arg8[%c0_27, %c0_28], %27 {strides = array<i32>} : memref<1x128xf32, #tpu.memory_space<vmem>>, vector<1x128xf32>,
    } else {
    }
    %c8_i32 = arith.constant 8 : i32
    %3 = arith.muli %arg0, %c8_i32 : i32
    %c8_i32_1 = arith.constant 8 : i32
    %4 = arith.subi %c8_i32_1, %3 : i32
    %c0 = arith.constant 0 : index
    %c0_2 = arith.constant 0 : index
    %5 = vector.load %arg3[%c0, %c0_2] : memref<128x128xf32, #tpu.memory_space<vmem>>, vector<128x128xf32>
    %c0_3 = arith.constant 0 : index
    %c0_4 = arith.constant 0 : index
    %6 = vector.load %arg1[%c0_3, %c0_4] : memref<8x8xf32, #tpu.memory_space<vmem>>, vector<8x8xf32>
    %c0_5 = arith.constant 0 : index
    %c0_6 = arith.constant 0 : index
    %7 = vector.load %arg2[%c0_5, %c0_6] : memref<8x128xf32, #tpu.memory_space<vmem>>, vector<8x128xf32>
    %cst = arith.constant dense<0.000000e+00> : vector<8x128xf32>
    %8 = tpu.matmul %6, %7, %cst {dimension_numbers = #tpu.dot_dimension_numbers<[1], [0], [0], [1], [0, 0, 1, 1], [], []>} : vector<8x8xf32>, vector<8x128xf32>, vector<8x128xf32> -> vector<8x128xf32>
    %c0_7 = arith.constant 0 : index
    %c0_8 = arith.constant 0 : index
    %9 = vector.load %arg4[%c0_7, %c0_8] : memref<1x128xf32, #tpu.memory_space<vmem>>, vector<1x128xf32>
    %10 = vector.broadcast %9 : vector<1x128xf32> to vector<8x128xf32>
    %11 = arith.addf %8, %10 : vector<8x128xf32>
    %c0_9 = arith.constant 0 : index
    %c0_10 = arith.constant 0 : index
    %12 = vector.load %arg9[%c0_9, %c0_10] : memref<8x128xf32, #tpu.memory_space<vmem>>, vector<8x128xf32>
    tpu.vector_store %arg9[%c0_9, %c0_10], %11 {strides = array<i32>} : memref<8x128xf32, #tpu.memory_space<vmem>>, vector<8x128xf32>,
    %c0_11 = arith.constant 0 : index
    %c0_12 = arith.constant 0 : index
    %13 = vector.load %arg8[%c0_11, %c0_12] : memref<1x128xf32, #tpu.memory_space<vmem>>, vector<1x128xf32>
    %c8_i32_13 = arith.constant 8 : i32
    %14 = arith.cmpi sge, %4, %c8_i32_13 : i32
    %15 = arith.extui %14 : i1 to i32
    %c0_i32_14 = arith.constant 0 : i32
    %16 = arith.cmpi ne, %15, %c0_i32_14 : i32
    scf.if %16 {
      %c0_i32_26 = arith.constant 0 : i32
      %c8_i32_27 = arith.constant 8 : i32
      %27 = arith.muli %c0_i32_26, %c8_i32_27 : i32
      %28 = tpu.assume_multiple %27, 8 : i32
      %29 = arith.index_cast %28 : i32 to index
      %c0_28 = arith.constant 0 : index
      %30 = vector.load %arg9[%29, %c0_28] : memref<8x128xf32, #tpu.memory_space<vmem>>, vector<8x128xf32>
      %31 = vector.extract_strided_slice %30 {offsets = [0, 0], sizes = [1, 128], strides = [1, 1]} : vector<8x128xf32> to vector<1x128xf32>
      %cst_29 = arith.constant dense<0.000000e+00> : vector<1x128xf32>
      %32 = tpu.matmul %13, %5, %cst_29 {dimension_numbers = #tpu.dot_dimension_numbers<[1], [0], [0], [1], [0, 0, 1, 1], [], []>} : vector<1x128xf32>, vector<128x128xf32>, vector<1x128xf32> -> vector<1x128xf32>
      %33 = arith.addf %31, %32 : vector<1x128xf32>
      %cst_30 = arith.constant 0.000000e+00 : f32
      %34 = vector.broadcast %cst_30 : f32 to vector<1x128xf32>
      %35 = arith.maximumf %33, %34 : vector<1x128xf32>
      %36 = vector.extract_strided_slice %30 {offsets = [1, 0], sizes = [1, 128], strides = [1, 1]} : vector<8x128xf32> to vector<1x128xf32>
      %cst_31 = arith.constant dense<0.000000e+00> : vector<1x128xf32>
      %37 = tpu.matmul %35, %5, %cst_31 {dimension_numbers = #tpu.dot_dimension_numbers<[1], [0], [0], [1], [0, 0, 1, 1], [], []>} : vector<1x128xf32>, vector<128x128xf32>, vector<1x128xf32> -> vector<1x128xf32>
      %38 = arith.addf %36, %37 : vector<1x128xf32>
      %cst_32 = arith.constant 0.000000e+00 : f32
      %39 = vector.broadcast %cst_32 : f32 to vector<1x128xf32>
      %40 = arith.maximumf %38, %39 : vector<1x128xf32>
      %41 = vector.extract_strided_slice %30 {offsets = [2, 0], sizes = [1, 128], strides = [1, 1]} : vector<8x128xf32> to vector<1x128xf32>
      %cst_33 = arith.constant dense<0.000000e+00> : vector<1x128xf32>
      %42 = tpu.matmul %40, %5, %cst_33 {dimension_numbers = #tpu.dot_dimension_numbers<[1], [0], [0], [1], [0, 0, 1, 1], [], []>} : vector<1x128xf32>, vector<128x128xf32>, vector<1x128xf32> -> vector<1x128xf32>
      %43 = arith.addf %41, %42 : vector<1x128xf32>
      %cst_34 = arith.constant 0.000000e+00 : f32
      %44 = vector.broadcast %cst_34 : f32 to vector<1x128xf32>
      %45 = arith.maximumf %43, %44 : vector<1x128xf32>
      %46 = vector.extract_strided_slice %30 {offsets = [3, 0], sizes = [1, 128], strides = [1, 1]} : vector<8x128xf32> to vector<1x128xf32>
      %cst_35 = arith.constant dense<0.000000e+00> : vector<1x128xf32>
      %47 = tpu.matmul %45, %5, %cst_35 {dimension_numbers = #tpu.dot_dimension_numbers<[1], [0], [0], [1], [0, 0, 1, 1], [], []>} : vector<1x128xf32>, vector<128x128xf32>, vector<1x128xf32> -> vector<1x128xf32>
      %48 = arith.addf %46, %47 : vector<1x128xf32>
      %cst_36 = arith.constant 0.000000e+00 : f32
      %49 = vector.broadcast %cst_36 : f32 to vector<1x128xf32>
      %50 = arith.maximumf %48, %49 : vector<1x128xf32>
      %51 = vector.extract_strided_slice %30 {offsets = [4, 0], sizes = [1, 128], strides = [1, 1]} : vector<8x128xf32> to vector<1x128xf32>
      %cst_37 = arith.constant dense<0.000000e+00> : vector<1x128xf32>
      %52 = tpu.matmul %50, %5, %cst_37 {dimension_numbers = #tpu.dot_dimension_numbers<[1], [0], [0], [1], [0, 0, 1, 1], [], []>} : vector<1x128xf32>, vector<128x128xf32>, vector<1x128xf32> -> vector<1x128xf32>
      %53 = arith.addf %51, %52 : vector<1x128xf32>
      %cst_38 = arith.constant 0.000000e+00 : f32
      %54 = vector.broadcast %cst_38 : f32 to vector<1x128xf32>
      %55 = arith.maximumf %53, %54 : vector<1x128xf32>
      %56 = vector.extract_strided_slice %30 {offsets = [5, 0], sizes = [1, 128], strides = [1, 1]} : vector<8x128xf32> to vector<1x128xf32>
      %cst_39 = arith.constant dense<0.000000e+00> : vector<1x128xf32>
      %57 = tpu.matmul %55, %5, %cst_39 {dimension_numbers = #tpu.dot_dimension_numbers<[1], [0], [0], [1], [0, 0, 1, 1], [], []>} : vector<1x128xf32>, vector<128x128xf32>, vector<1x128xf32> -> vector<1x128xf32>
      %58 = arith.addf %56, %57 : vector<1x128xf32>
      %cst_40 = arith.constant 0.000000e+00 : f32
      %59 = vector.broadcast %cst_40 : f32 to vector<1x128xf32>
      %60 = arith.maximumf %58, %59 : vector<1x128xf32>
      %61 = vector.extract_strided_slice %30 {offsets = [6, 0], sizes = [1, 128], strides = [1, 1]} : vector<8x128xf32> to vector<1x128xf32>
      %cst_41 = arith.constant dense<0.000000e+00> : vector<1x128xf32>
      %62 = tpu.matmul %60, %5, %cst_41 {dimension_numbers = #tpu.dot_dimension_numbers<[1], [0], [0], [1], [0, 0, 1, 1], [], []>} : vector<1x128xf32>, vector<128x128xf32>, vector<1x128xf32> -> vector<1x128xf32>
      %63 = arith.addf %61, %62 : vector<1x128xf32>
      %cst_42 = arith.constant 0.000000e+00 : f32
      %64 = vector.broadcast %cst_42 : f32 to vector<1x128xf32>
      %65 = arith.maximumf %63, %64 : vector<1x128xf32>
      %66 = vector.extract_strided_slice %30 {offsets = [7, 0], sizes = [1, 128], strides = [1, 1]} : vector<8x128xf32> to vector<1x128xf32>
      %cst_43 = arith.constant dense<0.000000e+00> : vector<1x128xf32>
      %67 = tpu.matmul %65, %5, %cst_43 {dimension_numbers = #tpu.dot_dimension_numbers<[1], [0], [0], [1], [0, 0, 1, 1], [], []>} : vector<1x128xf32>, vector<128x128xf32>, vector<1x128xf32> -> vector<1x128xf32>
      %68 = arith.addf %66, %67 : vector<1x128xf32>
      %cst_44 = arith.constant 0.000000e+00 : f32
      %69 = vector.broadcast %cst_44 : f32 to vector<1x128xf32>
      %70 = arith.maximumf %68, %69 : vector<1x128xf32>
      %71 = tpu.concatenate %35, %40, %45, %50, %55, %60, %65, %70 in 0 : vector<1x128xf32>, vector<1x128xf32>, vector<1x128xf32>, vector<1x128xf32>, vector<1x128xf32>, vector<1x128xf32>, vector<1x128xf32>, vector<1x128xf32> -> vector<8x128xf32>
      %72 = arith.index_cast %28 : i32 to index
      %c0_45 = arith.constant 0 : index
      %73 = vector.load %arg10[%72, %c0_45] : memref<8x128xf32, #tpu.memory_space<vmem>>, vector<8x128xf32>
      tpu.vector_store %arg10[%72, %c0_45], %71 {strides = array<i32>} : memref<8x128xf32, #tpu.memory_space<vmem>>, vector<8x128xf32>,
      %c1_i32 = arith.constant 1 : i32
      %c0_46 = arith.constant 0 : index
      %c0_47 = arith.constant 0 : index
      %74 = vector.load %arg8[%c0_46, %c0_47] : memref<1x128xf32, #tpu.memory_space<vmem>>, vector<1x128xf32>
      tpu.vector_store %arg8[%c0_46, %c0_47], %70 {strides = array<i32>} : memref<1x128xf32, #tpu.memory_space<vmem>>, vector<1x128xf32>,
    } else {
    }
    %c8_i32_15 = arith.constant 8 : i32
    %17 = arith.cmpi slt, %4, %c8_i32_15 : i32
    %18 = arith.extui %17 : i1 to i32
    %c0_i32_16 = arith.constant 0 : i32
    %19 = arith.cmpi ne, %18, %c0_i32_16 : i32
    scf.if %19 {
      %c0_i32_26 = arith.constant 0 : i32
      %c8_i32_27 = arith.constant 8 : i32
      %27 = arith.muli %c0_i32_26, %c8_i32_27 : i32
      %28 = tpu.assume_multiple %27, 8 : i32
      %29 = arith.index_cast %28 : i32 to index
      %c0_28 = arith.constant 0 : index
      %30 = vector.load %arg9[%29, %c0_28] : memref<8x128xf32, #tpu.memory_space<vmem>>, vector<8x128xf32>
      %31 = vector.extract_strided_slice %30 {offsets = [0, 0], sizes = [1, 128], strides = [1, 1]} : vector<8x128xf32> to vector<1x128xf32>
      %cst_29 = arith.constant dense<0.000000e+00> : vector<1x128xf32>
      %32 = tpu.matmul %13, %5, %cst_29 {dimension_numbers = #tpu.dot_dimension_numbers<[1], [0], [0], [1], [0, 0, 1, 1], [], []>} : vector<1x128xf32>, vector<128x128xf32>, vector<1x128xf32> -> vector<1x128xf32>
      %33 = arith.addf %31, %32 : vector<1x128xf32>
      %cst_30 = arith.constant 0.000000e+00 : f32
      %34 = vector.broadcast %cst_30 : f32 to vector<1x128xf32>
      %35 = arith.maximumf %33, %34 : vector<1x128xf32>
      %c0_i32_31 = arith.constant 0 : i32
      %36 = arith.addi %28, %c0_i32_31 : i32
      %37 = arith.cmpi slt, %36, %4 : i32
      %38 = arith.select %37, %35, %13 : vector<1x128xf32>
      %39 = vector.extract_strided_slice %30 {offsets = [1, 0], sizes = [1, 128], strides = [1, 1]} : vector<8x128xf32> to vector<1x128xf32>
      %cst_32 = arith.constant dense<0.000000e+00> : vector<1x128xf32>
      %40 = tpu.matmul %38, %5, %cst_32 {dimension_numbers = #tpu.dot_dimension_numbers<[1], [0], [0], [1], [0, 0, 1, 1], [], []>} : vector<1x128xf32>, vector<128x128xf32>, vector<1x128xf32> -> vector<1x128xf32>
      %41 = arith.addf %39, %40 : vector<1x128xf32>
      %cst_33 = arith.constant 0.000000e+00 : f32
      %42 = vector.broadcast %cst_33 : f32 to vector<1x128xf32>
      %43 = arith.maximumf %41, %42 : vector<1x128xf32>
      %c1_i32 = arith.constant 1 : i32
      %44 = arith.addi %28, %c1_i32 : i32
      %45 = arith.cmpi slt, %44, %4 : i32
      %46 = arith.select %45, %43, %38 : vector<1x128xf32>
      %47 = vector.extract_strided_slice %30 {offsets = [2, 0], sizes = [1, 128], strides = [1, 1]} : vector<8x128xf32> to vector<1x128xf32>
      %cst_34 = arith.constant dense<0.000000e+00> : vector<1x128xf32>
      %48 = tpu.matmul %46, %5, %cst_34 {dimension_numbers = #tpu.dot_dimension_numbers<[1], [0], [0], [1], [0, 0, 1, 1], [], []>} : vector<1x128xf32>, vector<128x128xf32>, vector<1x128xf32> -> vector<1x128xf32>
      %49 = arith.addf %47, %48 : vector<1x128xf32>
      %cst_35 = arith.constant 0.000000e+00 : f32
      %50 = vector.broadcast %cst_35 : f32 to vector<1x128xf32>
      %51 = arith.maximumf %49, %50 : vector<1x128xf32>
      %c2_i32 = arith.constant 2 : i32
      %52 = arith.addi %28, %c2_i32 : i32
      %53 = arith.cmpi slt, %52, %4 : i32
      %54 = arith.select %53, %51, %46 : vector<1x128xf32>
      %55 = vector.extract_strided_slice %30 {offsets = [3, 0], sizes = [1, 128], strides = [1, 1]} : vector<8x128xf32> to vector<1x128xf32>
      %cst_36 = arith.constant dense<0.000000e+00> : vector<1x128xf32>
      %56 = tpu.matmul %54, %5, %cst_36 {dimension_numbers = #tpu.dot_dimension_numbers<[1], [0], [0], [1], [0, 0, 1, 1], [], []>} : vector<1x128xf32>, vector<128x128xf32>, vector<1x128xf32> -> vector<1x128xf32>
      %57 = arith.addf %55, %56 : vector<1x128xf32>
      %cst_37 = arith.constant 0.000000e+00 : f32
      %58 = vector.broadcast %cst_37 : f32 to vector<1x128xf32>
      %59 = arith.maximumf %57, %58 : vector<1x128xf32>
      %c3_i32 = arith.constant 3 : i32
      %60 = arith.addi %28, %c3_i32 : i32
      %61 = arith.cmpi slt, %60, %4 : i32
      %62 = arith.select %61, %59, %54 : vector<1x128xf32>
      %63 = vector.extract_strided_slice %30 {offsets = [4, 0], sizes = [1, 128], strides = [1, 1]} : vector<8x128xf32> to vector<1x128xf32>
      %cst_38 = arith.constant dense<0.000000e+00> : vector<1x128xf32>
      %64 = tpu.matmul %62, %5, %cst_38 {dimension_numbers = #tpu.dot_dimension_numbers<[1], [0], [0], [1], [0, 0, 1, 1], [], []>} : vector<1x128xf32>, vector<128x128xf32>, vector<1x128xf32> -> vector<1x128xf32>
      %65 = arith.addf %63, %64 : vector<1x128xf32>
      %cst_39 = arith.constant 0.000000e+00 : f32
      %66 = vector.broadcast %cst_39 : f32 to vector<1x128xf32>
      %67 = arith.maximumf %65, %66 : vector<1x128xf32>
      %c4_i32 = arith.constant 4 : i32
      %68 = arith.addi %28, %c4_i32 : i32
      %69 = arith.cmpi slt, %68, %4 : i32
      %70 = arith.select %69, %67, %62 : vector<1x128xf32>
      %71 = vector.extract_strided_slice %30 {offsets = [5, 0], sizes = [1, 128], strides = [1, 1]} : vector<8x128xf32> to vector<1x128xf32>
      %cst_40 = arith.constant dense<0.000000e+00> : vector<1x128xf32>
      %72 = tpu.matmul %70, %5, %cst_40 {dimension_numbers = #tpu.dot_dimension_numbers<[1], [0], [0], [1], [0, 0, 1, 1], [], []>} : vector<1x128xf32>, vector<128x128xf32>, vector<1x128xf32> -> vector<1x128xf32>
      %73 = arith.addf %71, %72 : vector<1x128xf32>
      %cst_41 = arith.constant 0.000000e+00 : f32
      %74 = vector.broadcast %cst_41 : f32 to vector<1x128xf32>
      %75 = arith.maximumf %73, %74 : vector<1x128xf32>
      %c5_i32 = arith.constant 5 : i32
      %76 = arith.addi %28, %c5_i32 : i32
      %77 = arith.cmpi slt, %76, %4 : i32
      %78 = arith.select %77, %75, %70 : vector<1x128xf32>
      %79 = vector.extract_strided_slice %30 {offsets = [6, 0], sizes = [1, 128], strides = [1, 1]} : vector<8x128xf32> to vector<1x128xf32>
      %cst_42 = arith.constant dense<0.000000e+00> : vector<1x128xf32>
      %80 = tpu.matmul %78, %5, %cst_42 {dimension_numbers = #tpu.dot_dimension_numbers<[1], [0], [0], [1], [0, 0, 1, 1], [], []>} : vector<1x128xf32>, vector<128x128xf32>, vector<1x128xf32> -> vector<1x128xf32>
      %81 = arith.addf %79, %80 : vector<1x128xf32>
      %cst_43 = arith.constant 0.000000e+00 : f32
      %82 = vector.broadcast %cst_43 : f32 to vector<1x128xf32>
      %83 = arith.maximumf %81, %82 : vector<1x128xf32>
      %c6_i32 = arith.constant 6 : i32
      %84 = arith.addi %28, %c6_i32 : i32
      %85 = arith.cmpi slt, %84, %4 : i32
      %86 = arith.select %85, %83, %78 : vector<1x128xf32>
      %87 = vector.extract_strided_slice %30 {offsets = [7, 0], sizes = [1, 128], strides = [1, 1]} : vector<8x128xf32> to vector<1x128xf32>
      %cst_44 = arith.constant dense<0.000000e+00> : vector<1x128xf32>
      %88 = tpu.matmul %86, %5, %cst_44 {dimension_numbers = #tpu.dot_dimension_numbers<[1], [0], [0], [1], [0, 0, 1, 1], [], []>} : vector<1x128xf32>, vector<128x128xf32>, vector<1x128xf32> -> vector<1x128xf32>
      %89 = arith.addf %87, %88 : vector<1x128xf32>
      %cst_45 = arith.constant 0.000000e+00 : f32
      %90 = vector.broadcast %cst_45 : f32 to vector<1x128xf32>
      %91 = arith.maximumf %89, %90 : vector<1x128xf32>
      %c7_i32 = arith.constant 7 : i32
      %92 = arith.addi %28, %c7_i32 : i32
      %93 = arith.cmpi slt, %92, %4 : i32
      %94 = arith.select %93, %91, %86 : vector<1x128xf32>
      %95 = tpu.concatenate %38, %46, %54, %62, %70, %78, %86, %94 in 0 : vector<1x128xf32>, vector<1x128xf32>, vector<1x128xf32>, vector<1x128xf32>, vector<1x128xf32>, vector<1x128xf32>, vector<1x128xf32>, vector<1x128xf32> -> vector<8x128xf32>
      %96 = arith.index_cast %28 : i32 to index
      %c0_46 = arith.constant 0 : index
      %97 = vector.load %arg10[%96, %c0_46] : memref<8x128xf32, #tpu.memory_space<vmem>>, vector<8x128xf32>
      tpu.vector_store %arg10[%96, %c0_46], %95 {strides = array<i32>} : memref<8x128xf32, #tpu.memory_space<vmem>>, vector<8x128xf32>,
      %c1_i32_47 = arith.constant 1 : i32
      %c0_48 = arith.constant 0 : index
      %c0_49 = arith.constant 0 : index
      %98 = vector.load %arg8[%c0_48, %c0_49] : memref<1x128xf32, #tpu.memory_space<vmem>>, vector<1x128xf32>
      tpu.vector_store %arg8[%c0_48, %c0_49], %94 {strides = array<i32>} : memref<1x128xf32, #tpu.memory_space<vmem>>, vector<1x128xf32>,
    } else {
    }
    %c0_17 = arith.constant 0 : index
    %c0_18 = arith.constant 0 : index
    %20 = vector.load %arg10[%c0_17, %c0_18] : memref<8x128xf32, #tpu.memory_space<vmem>>, vector<8x128xf32>
    %c0_19 = arith.constant 0 : index
    %c0_20 = arith.constant 0 : index
    %21 = vector.load %arg5[%c0_19, %c0_20] : memref<128x128xf32, #tpu.memory_space<vmem>>, vector<128x128xf32>
    %cst_21 = arith.constant dense<0.000000e+00> : vector<8x128xf32>
    %22 = tpu.matmul %20, %21, %cst_21 {dimension_numbers = #tpu.dot_dimension_numbers<[1], [0], [0], [1], [0, 0, 1, 1], [], []>} : vector<8x128xf32>, vector<128x128xf32>, vector<8x128xf32> -> vector<8x128xf32>
    %c0_22 = arith.constant 0 : index
    %c0_23 = arith.constant 0 : index
    %23 = vector.load %arg6[%c0_22, %c0_23] : memref<1x128xf32, #tpu.memory_space<vmem>>, vector<1x128xf32>
    %24 = vector.broadcast %23 : vector<1x128xf32> to vector<8x128xf32>
    %25 = arith.addf %22, %24 : vector<8x128xf32>
    %c0_24 = arith.constant 0 : index
    %c0_25 = arith.constant 0 : index
    %26 = vector.load %arg7[%c0_24, %c0_25] : memref<8x128xf32, #tpu.memory_space<vmem>>, vector<8x128xf32>
    tpu.vector_store %arg7[%c0_24, %c0_25], %25 {strides = array<i32>} : memref<8x128xf32, #tpu.memory_space<vmem>>, vector<8x128xf32>,
    return
  }
  func.func @transform_0(%arg0: i32) -> (i32, i32) {
    %c0_i32 = arith.constant 0 : i32
    %c0_i32_0 = arith.constant 0 : i32
    return %arg0, %c0_i32 : i32, i32
  }
  func.func @transform_1(%arg0: i32) -> (i32, i32) {
    %c0_i32 = arith.constant 0 : i32
    %c0_i32_0 = arith.constant 0 : i32
    %c0_i32_1 = arith.constant 0 : i32
    return %c0_i32, %c0_i32_0 : i32, i32
  }
  func.func @transform_2(%arg0: i32) -> (i32, i32) {
    %c0_i32 = arith.constant 0 : i32
    %c0_i32_0 = arith.constant 0 : i32
    %c0_i32_1 = arith.constant 0 : i32
    return %c0_i32, %c0_i32_0 : i32, i32
  }
  func.func @transform_3(%arg0: i32) -> (i32, i32) {
    %c0_i32 = arith.constant 0 : i32
    %c0_i32_0 = arith.constant 0 : i32
    %c0_i32_1 = arith.constant 0 : i32
    return %c0_i32, %c0_i32_0 : i32, i32
  }
  func.func @transform_4(%arg0: i32) -> (i32, i32) {
    %c0_i32 = arith.constant 0 : i32
    %c0_i32_0 = arith.constant 0 : i32
    %c0_i32_1 = arith.constant 0 : i32
    return %c0_i32, %c0_i32_0 : i32, i32
  }
  func.func @transform_5(%arg0: i32) -> (i32, i32) {
    %c0_i32 = arith.constant 0 : i32
    %c0_i32_0 = arith.constant 0 : i32
    %c0_i32_1 = arith.constant 0 : i32
    return %c0_i32, %c0_i32_0 : i32, i32
  }
  func.func @transform_6(%arg0: i32) -> (i32, i32) {
    %c0_i32 = arith.constant 0 : i32
    %c0_i32_0 = arith.constant 0 : i32
    return %arg0, %c0_i32 : i32, i32
  }
  func.func @transform_7(%arg0: i32) -> (i32, i32) {
    %c0_i32 = arith.constant 0 : i32
    %c0_i32_0 = arith.constant 0 : i32
    %c0_i32_1 = arith.constant 0 : i32
    return %c0_i32, %c0_i32_0 : i32, i32
  }
}

</mosaic_0001>

<llo_original>
// kernel: two_feature_rnn_forward.1
$region0: #{two_feature_rnn_forward.1}
  #allocation0 [shape = 'u32[]', space=smem, size = 0x4, offset = 0x4, fixed_abs, tag = 'smem constant byte address 0x4 - core index']
  #allocation1 [shape = 'u32[144,128]{1,0:T(1,128)}', space=vmem, size = 0x12000, scoped, tag = 'internal scratch']
  #allocation2 [shape = 'f32[8,128]{1,0:T(8,128)}', space=vmem, size = 0x1000, scoped, tag = 'scratch operand']
  #allocation3 [shape = 'f32[8,128]{1,0:T(8,128)}', space=vmem, size = 0x1000, scoped, tag = 'scratch operand']
  %s0 = inlined_call_operand.vmem [shape: f32[8,8], index: 0, kind: input, shape index: {}]
  %s1 = inlined_call_operand.vmem [shape: f32[8,128], index: 1, kind: input, shape index: {}]
  %s2 = inlined_call_operand.vmem [shape: f32[128,128], index: 2, kind: input, shape index: {}]
  %s3 = inlined_call_operand.vmem [shape: f32[1,128], index: 3, kind: input, shape index: {}]
  %s4 = inlined_call_operand.vmem [shape: f32[128,128], index: 4, kind: input, shape index: {}]
  %s5 = inlined_call_operand.vmem [shape: f32[1,128], index: 5, kind: input, shape index: {}]
  %s6 = inlined_call_operand.vmem [shape: f32[8,128], index: 6, kind: output, shape index: {0}]
  %s7 = inlined_call_operand.vmem [shape: f32[1,128], index: 7, kind: output, shape index: {1}]
  %8 = xla_tuple %s6, %s7
  %s9 = sld [smem:[#allocation0]]
  $region54: #{two_feature_rnn_forward.1} parent=0
    _
  %s11 = ssub.s32 1, %s9
  %s12 = scalar_select 0, %s11, %s9
  // Predicated region
  $region2: #{two_feature_rnn_forward.1} parent=0 // pred_check
    _
  $region3: #{two_feature_rnn_forward.1} parent=0 // pred_check_branch
    %14 = sbr.rel (0) target = $region5
  $region4: #{two_feature_rnn_forward.1} parent=0 // pred_region
    _
  $region5: #{two_feature_rnn_forward.1} parent=0 // pred_fallthru
    _
  // Predicated region
  $region6: #{two_feature_rnn_forward.1} parent=0 // pred_check
    _
  $region7: #{two_feature_rnn_forward.1} parent=0 // pred_check_branch
    %16 = sbr.rel (0) target = $region9
  $region8: #{two_feature_rnn_forward.1} parent=0 // pred_region
    _
  $region9: #{two_feature_rnn_forward.1} parent=0 // pred_fallthru
    _
  // Predicated region
  $region10: #{two_feature_rnn_forward.1} parent=0 // pred_check
    _
  $region11: #{two_feature_rnn_forward.1} parent=0 // pred_check_branch
    %18 = sbr.rel (0) target = $region13
  $region12: #{two_feature_rnn_forward.1} parent=0 // pred_region
    _
  $region13: #{two_feature_rnn_forward.1} parent=0 // pred_fallthru
    _
  // Predicated region
  $region14: #{two_feature_rnn_forward.1} parent=0 // pred_check
    _
  $region15: #{two_feature_rnn_forward.1} parent=0 // pred_check_branch
    %20 = sbr.rel (0) target = $region17
  $region16: #{two_feature_rnn_forward.1} parent=0 // pred_region
    _
  $region17: #{two_feature_rnn_forward.1} parent=0 // pred_fallthru
    _
  // Predicated region
  $region18: #{two_feature_rnn_forward.1} parent=0 // pred_check
    _
  $region19: #{two_feature_rnn_forward.1} parent=0 // pred_check_branch
    %22 = sbr.rel (0) target = $region21
  $region20: #{two_feature_rnn_forward.1} parent=0 // pred_region
    _
  $region21: #{two_feature_rnn_forward.1} parent=0 // pred_fallthru
    _
  // Predicated region
  $region22: #{two_feature_rnn_forward.1} parent=0 // pred_check
    _
  $region23: #{two_feature_rnn_forward.1} parent=0 // pred_check_branch
    %24 = sbr.rel (0) target = $region25
  $region24: #{two_feature_rnn_forward.1} parent=0 // pred_region
    _
  $region25: #{two_feature_rnn_forward.1} parent=0 // pred_fallthru
    _
  %p25 = scmp.eq.s32.totalorder 0, 0
  // Predicated region
  $region26: #{two_feature_rnn_forward.1} parent=0 // pred_check
    %p26 = pneg %p25
  $region27: #{two_feature_rnn_forward.1} parent=0 // pred_check_branch
    %28 = sbr.rel (%p26) target = $region29
  $region28: #{two_feature_rnn_forward.1} parent=0 // pred_region
    %29 = vst [vmem:[%s7] sm:$0x1] 0.0
  $region29: #{two_feature_rnn_forward.1} parent=0 // pred_fallthru
    _
  %s30 = smul.u32 0, 8
  %s31 = ssub.s32 8, %s30
  %v32 = vld [vmem:[%s2] sm:$0xff]
  %v33 = vld [vmem:[%s2 + $0x8] sm:$0xff]
  %v34 = vld [vmem:[%s2 + $0x10] sm:$0xff]
  %v35 = vld [vmem:[%s2 + $0x18] sm:$0xff]
  %v36 = vld [vmem:[%s2 + $0x20] sm:$0xff]
  %v37 = vld [vmem:[%s2 + $0x28] sm:$0xff]
  %v38 = vld [vmem:[%s2 + $0x30] sm:$0xff]
  %v39 = vld [vmem:[%s2 + $0x38] sm:$0xff]
  %v40 = vld [vmem:[%s2 + $0x40] sm:$0xff]
  %v41 = vld [vmem:[%s2 + $0x48] sm:$0xff]
  %v42 = vld [vmem:[%s2 + $0x50] sm:$0xff]
  %v43 = vld [vmem:[%s2 + $0x58] sm:$0xff]
  %v44 = vld [vmem:[%s2 + $0x60] sm:$0xff]
  %v45 = vld [vmem:[%s2 + $0x68] sm:$0xff]
  %v46 = vld [vmem:[%s2 + $0x70] sm:$0xff]
  %v47 = vld [vmem:[%s2 + $0x78] sm:$0xff]
  %v48 = vld [vmem:[%s0] sm:$0xff]
  %v49 = vld [vmem:[%s1] sm:$0xff]
  %v50 = vld [vmem:[%s3] sm:$0x1]
  %v52 = vlaneseq
  %v53 = vshrl.u32 %v52, 7
  %v54 = vsub.s32 0, %v53
  %v55 = vrot.slane %v50, %v54
  %vm57 = vcmask 64512
  %v59 = vsel %vm57, %v48, 0
  %61 = vmatprep.subr.mxu0 0.0
  %62 = vmatpush1.msra.mxu0 %v49
  %63 = vmatprep.subr.mxu0 0.0
  %64 = vmatpush1.msra.mxu0 0.0
  %65 = vmatprep.subr.mxu0 0.0
  %66 = vmatpush1.msra.mxu0 0.0
  %67 = vmatprep.subr.mxu0 0.0
  %68 = vmatpush1.msra.mxu0 0.0
  %69 = vmatprep.subr.mxu0 0.0
  %70 = vmatpush1.msra.mxu0 0.0
  %71 = vmatprep.subr.mxu0 0.0
  %72 = vmatpush1.msra.mxu0 0.0
  %73 = vmatprep.subr.mxu0 0.0
  %74 = vmatpush1.msra.mxu0 0.0
  %75 = vmatprep.subr.mxu0 0.0
  %76 = vmatpush1.msra.mxu0 0.0
  %77 = vmatprep.subr.mxu0 0.0
  %78 = vmatpush1.msra.mxu0 0.0
  %79 = vmatprep.subr.mxu0 0.0
  %80 = vmatpush1.msra.mxu0 0.0
  %81 = vmatprep.subr.mxu0 0.0
  %82 = vmatpush1.msra.mxu0 0.0
  %83 = vmatprep.subr.mxu0 0.0
  %84 = vmatpush1.msra.mxu0 0.0
  %85 = vmatprep.subr.mxu0 0.0
  %86 = vmatpush1.msra.mxu0 0.0
  %87 = vmatprep.subr.mxu0 0.0
  %88 = vmatpush1.msra.mxu0 0.0
  %89 = vmatprep.subr.mxu0 0.0
  %90 = vmatpush1.msra.mxu0 0.0
  %91 = vmatprep.subr.mxu0 0.0
  %92 = vmatpush1.msra.mxu0 0.0
  %93 = vmatprep.subr.mxu0 0.0
  %94 = vmatpush1.msra.mxu0 0.0
  %95 = vmatprep.subr.mxu0 0.0
  %96 = vmatpush1.msra.mxu0 0.0
  %97 = vmatprep.subr.mxu0 0.0
  %98 = vmatpush1.msra.mxu0 0.0
  %99 = vmatprep.subr.mxu0 0.0
  %100 = vmatpush1.msra.mxu0 0.0
  %101 = vmatprep.subr.mxu0 0.0
  %102 = vmatpush1.msra.mxu0 0.0
  %103 = vmatprep.subr.mxu0 0.0
  %104 = vmatpush1.msra.mxu0 0.0
  %105 = vmatprep.subr.mxu0 0.0
  %106 = vmatpush1.msra.mxu0 0.0
  %107 = vmatprep.subr.mxu0 0.0
  %108 = vmatpush1.msra.mxu0 0.0
  %109 = vmatprep.subr.mxu0 0.0
  %110 = vmatpush1.msra.mxu0 0.0
  %111 = vmatprep.subr.mxu0 0.0
  %112 = vmatpush1.msra.mxu0 0.0
  %113 = vmatprep.subr.mxu0 0.0
  %114 = vmatpush1.msra.mxu0 0.0
  %115 = vmatprep.subr.mxu0 0.0
  %116 = vmatpush1.msra.mxu0 0.0
  %117 = vmatprep.subr.mxu0 0.0
  %118 = vmatpush1.msra.mxu0 0.0
  %119 = vmatprep.subr.mxu0 0.0
  %120 = vmatpush1.msra.mxu0 0.0
  %121 = vmatprep.subr.mxu0 0.0
  %122 = vmatpush1.msra.mxu0 0.0
  %123 = vmatprep.subr.mxu0 0.0
  %124 = vmatpush1.msra.mxu0 0.0
  %125 = vmatprep.mubr.f32.mxu0 0.0
  %126 = vmatmul.mubr.f32.gmra.mrb[0].mxu0 %v59
  %v127 = vpop.f32.mrb[0].mxu0
  %v128 = vadd.f32 %v55, %v127
  %v129 = vpop.f32.mrb[0].mxu0
  %130 = vdwg.mxu0
  %131 = vst [vmem:[#allocation2] sm:$0xff] %v128
  %v132 = vld [vmem:[%s7] sm:$0x1]
  %p133 = scmp.ge.s32.totalorder %s31, 8
  // Predicated region
  $region30: #{two_feature_rnn_forward.1} parent=0 // pred_check
    %p134 = pneg %p133
  $region31: #{two_feature_rnn_forward.1} parent=0 // pred_check_branch
    %136 = sbr.rel (%p134) target = $region33
  $region32: #{two_feature_rnn_forward.1} parent=0 // pred_region
    %v137 = vld [vmem:[#allocation2] sm:$0xff]
    %138 = vmatprep.subr.mxu0 0.0
    %139 = vmatpush1.msra.mxu0 %v32
    %140 = vmatprep.subr.mxu0 0.0
    %141 = vmatpush1.msra.mxu0 %v33
    %142 = vmatprep.subr.mxu0 0.0
    %143 = vmatpush1.msra.mxu0 %v34
    %144 = vmatprep.subr.mxu0 0.0
    %145 = vmatpush1.msra.mxu0 %v35
    %146 = vmatprep.subr.mxu0 0.0
    %147 = vmatpush1.msra.mxu0 %v36
    %148 = vmatprep.subr.mxu0 0.0
    %149 = vmatpush1.msra.mxu0 %v37
    %150 = vmatprep.subr.mxu0 0.0
    %151 = vmatpush1.msra.mxu0 %v38
    %152 = vmatprep.subr.mxu0 0.0
    %153 = vmatpush1.msra.mxu0 %v39
    %154 = vmatprep.subr.mxu0 0.0
    %155 = vmatpush1.msra.mxu0 %v40
    %156 = vmatprep.subr.mxu0 0.0
    %157 = vmatpush1.msra.mxu0 %v41
    %158 = vmatprep.subr.mxu0 0.0
    %159 = vmatpush1.msra.mxu0 %v42
    %160 = vmatprep.subr.mxu0 0.0
    %161 = vmatpush1.msra.mxu0 %v43
    %162 = vmatprep.subr.mxu0 0.0
    %163 = vmatpush1.msra.mxu0 %v44
    %164 = vmatprep.subr.mxu0 0.0
    %165 = vmatpush1.msra.mxu0 %v45
    %166 = vmatprep.subr.mxu0 0.0
    %167 = vmatpush1.msra.mxu0 %v46
    %168 = vmatprep.subr.mxu0 0.0
    %169 = vmatpush1.msra.mxu0 %v47
    %170 = vmatprep.subr.mxu0 0.0
    %171 = vmatpush1.msra.mxu0 0.0
    %172 = vmatprep.subr.mxu0 0.0
    %173 = vmatpush1.msra.mxu0 0.0
    %174 = vmatprep.subr.mxu0 0.0
    %175 = vmatpush1.msra.mxu0 0.0
    %176 = vmatprep.subr.mxu0 0.0
    %177 = vmatpush1.msra.mxu0 0.0
    %178 = vmatprep.subr.mxu0 0.0
    %179 = vmatpush1.msra.mxu0 0.0
    %180 = vmatprep.subr.mxu0 0.0
    %181 = vmatpush1.msra.mxu0 0.0
    %182 = vmatprep.subr.mxu0 0.0
    %183 = vmatpush1.msra.mxu0 0.0
    %184 = vmatprep.subr.mxu0 0.0
    %185 = vmatpush1.msra.mxu0 0.0
    %186 = vmatprep.subr.mxu0 0.0
    %187 = vmatpush1.msra.mxu0 0.0
    %188 = vmatprep.subr.mxu0 0.0
    %189 = vmatpush1.msra.mxu0 0.0
    %190 = vmatprep.subr.mxu0 0.0
    %191 = vmatpush1.msra.mxu0 0.0
    %192 = vmatprep.subr.mxu0 0.0
    %193 = vmatpush1.msra.mxu0 0.0
    %194 = vmatprep.subr.mxu0 0.0
    %195 = vmatpush1.msra.mxu0 0.0
    %196 = vmatprep.subr.mxu0 0.0
    %197 = vmatpush1.msra.mxu0 0.0
    %198 = vmatprep.subr.mxu0 0.0
    %199 = vmatpush1.msra.mxu0 0.0
    %200 = vmatprep.subr.mxu0 0.0
    %201 = vmatpush1.msra.mxu0 0.0
    %202 = vmatprep.mubr.f32.mxu0 0.0
    %203 = vmatmul.mubr.f32.gmra.mrb[0].mxu0 %v132
    %v204 = vpop.f32.mrb[0].mxu0
    %v205 = vadd.f32 0.0, %v204
    %v206 = vpop.f32.mrb[0].mxu0
    %207 = vdwg.mxu0
    %v208 = vadd.f32 %v137, %v205
    %v209 = vmax.f32 %v208, 0.0
    %210 = vmatprep.subr.mxu0 0.0
    %211 = vmatpush1.msra.mxu0 %v32
    %212 = vmatprep.subr.mxu0 0.0
    %213 = vmatpush1.msra.mxu0 %v33
    %214 = vmatprep.subr.mxu0 0.0
    %215 = vmatpush1.msra.mxu0 %v34
    %216 = vmatprep.subr.mxu0 0.0
    %217 = vmatpush1.msra.mxu0 %v35
    %218 = vmatprep.subr.mxu0 0.0
    %219 = vmatpush1.msra.mxu0 %v36
    %220 = vmatprep.subr.mxu0 0.0
    %221 = vmatpush1.msra.mxu0 %v37
    %222 = vmatprep.subr.mxu0 0.0
    %223 = vmatpush1.msra.mxu0 %v38
    %224 = vmatprep.subr.mxu0 0.0
    %225 = vmatpush1.msra.mxu0 %v39
    %226 = vmatprep.subr.mxu0 0.0
    %227 = vmatpush1.msra.mxu0 %v40
    %228 = vmatprep.subr.mxu0 0.0
    %229 = vmatpush1.msra.mxu0 %v41
    %230 = vmatprep.subr.mxu0 0.0
    %231 = vmatpush1.msra.mxu0 %v42
    %232 = vmatprep.subr.mxu0 0.0
    %233 = vmatpush1.msra.mxu0 %v43
    %234 = vmatprep.subr.mxu0 0.0
    %235 = vmatpush1.msra.mxu0 %v44
    %236 = vmatprep.subr.mxu0 0.0
    %237 = vmatpush1.msra.mxu0 %v45
    %238 = vmatprep.subr.mxu0 0.0
    %239 = vmatpush1.msra.mxu0 %v46
    %240 = vmatprep.subr.mxu0 0.0
    %241 = vmatpush1.msra.mxu0 %v47
    %242 = vmatprep.subr.mxu0 0.0
    %243 = vmatpush1.msra.mxu0 0.0
    %244 = vmatprep.subr.mxu0 0.0
    %245 = vmatpush1.msra.mxu0 0.0
    %246 = vmatprep.subr.mxu0 0.0
    %247 = vmatpush1.msra.mxu0 0.0
    %248 = vmatprep.subr.mxu0 0.0
    %249 = vmatpush1.msra.mxu0 0.0
    %250 = vmatprep.subr.mxu0 0.0
    %251 = vmatpush1.msra.mxu0 0.0
    %252 = vmatprep.subr.mxu0 0.0
    %253 = vmatpush1.msra.mxu0 0.0
    %254 = vmatprep.subr.mxu0 0.0
    %255 = vmatpush1.msra.mxu0 0.0
    %256 = vmatprep.subr.mxu0 0.0
    %257 = vmatpush1.msra.mxu0 0.0
    %258 = vmatprep.subr.mxu0 0.0
    %259 = vmatpush1.msra.mxu0 0.0
    %260 = vmatprep.subr.mxu0 0.0
    %261 = vmatpush1.msra.mxu0 0.0
    %262 = vmatprep.subr.mxu0 0.0
    %263 = vmatpush1.msra.mxu0 0.0
    %264 = vmatprep.subr.mxu0 0.0
    %265 = vmatpush1.msra.mxu0 0.0
    %266 = vmatprep.subr.mxu0 0.0
    %267 = vmatpush1.msra.mxu0 0.0
    %268 = vmatprep.subr.mxu0 0.0
    %269 = vmatpush1.msra.mxu0 0.0
    %270 = vmatprep.subr.mxu0 0.0
    %271 = vmatpush1.msra.mxu0 0.0
    %272 = vmatprep.subr.mxu0 0.0
    %273 = vmatpush1.msra.mxu0 0.0
    %274 = vmatprep.mubr.f32.mxu0 0.0
    %275 = vmatmul.mubr.f32.gmra.mrb[0].mxu0 %v209
    %v276 = vpop.f32.mrb[0].mxu0
    %v277 = vadd.f32 0.0, %v276
    %v278 = vpop.f32.mrb[0].mxu0
    %279 = vdwg.mxu0
    %v281 = vrot.slane %v277, 7
    %v283 = vadd.f32 %v137, %v281
    %v284 = vmax.f32 %v283, 0.0
    %v286 = vrot.slane %v284, 1
    %288 = vmatprep.subr.mxu0 0.0
    %289 = vmatpush1.msra.mxu0 %v32
    %290 = vmatprep.subr.mxu0 0.0
    %291 = vmatpush1.msra.mxu0 %v33
    %292 = vmatprep.subr.mxu0 0.0
    %293 = vmatpush1.msra.mxu0 %v34
    %294 = vmatprep.subr.mxu0 0.0
    %295 = vmatpush1.msra.mxu0 %v35
    %296 = vmatprep.subr.mxu0 0.0
    %297 = vmatpush1.msra.mxu0 %v36
    %298 = vmatprep.subr.mxu0 0.0
    %299 = vmatpush1.msra.mxu0 %v37
    %300 = vmatprep.subr.mxu0 0.0
    %301 = vmatpush1.msra.mxu0 %v38
    %302 = vmatprep.subr.mxu0 0.0
    %303 = vmatpush1.msra.mxu0 %v39
    %304 = vmatprep.subr.mxu0 0.0
    %305 = vmatpush1.msra.mxu0 %v40
    %306 = vmatprep.subr.mxu0 0.0
    %307 = vmatpush1.msra.mxu0 %v41
    %308 = vmatprep.subr.mxu0 0.0
    %309 = vmatpush1.msra.mxu0 %v42
    %310 = vmatprep.subr.mxu0 0.0
    %311 = vmatpush1.msra.mxu0 %v43
    %312 = vmatprep.subr.mxu0 0.0
    %313 = vmatpush1.msra.mxu0 %v44
    %314 = vmatprep.subr.mxu0 0.0
    %315 = vmatpush1.msra.mxu0 %v45
    %316 = vmatprep.subr.mxu0 0.0
    %317 = vmatpush1.msra.mxu0 %v46
    %318 = vmatprep.subr.mxu0 0.0
    %319 = vmatpush1.msra.mxu0 %v47
    %320 = vmatprep.subr.mxu0 0.0
    %321 = vmatpush1.msra.mxu0 0.0
    %322 = vmatprep.subr.mxu0 0.0
    %323 = vmatpush1.msra.mxu0 0.0
    %324 = vmatprep.subr.mxu0 0.0
    %325 = vmatpush1.msra.mxu0 0.0
    %326 = vmatprep.subr.mxu0 0.0
    %327 = vmatpush1.msra.mxu0 0.0
    %328 = vmatprep.subr.mxu0 0.0
    %329 = vmatpush1.msra.mxu0 0.0
    %330 = vmatprep.subr.mxu0 0.0
    %331 = vmatpush1.msra.mxu0 0.0
    %332 = vmatprep.subr.mxu0 0.0
    %333 = vmatpush1.msra.mxu0 0.0
    %334 = vmatprep.subr.mxu0 0.0
    %335 = vmatpush1.msra.mxu0 0.0
    %336 = vmatprep.subr.mxu0 0.0
    %337 = vmatpush1.msra.mxu0 0.0
    %338 = vmatprep.subr.mxu0 0.0
    %339 = vmatpush1.msra.mxu0 0.0
    %340 = vmatprep.subr.mxu0 0.0
    %341 = vmatpush1.msra.mxu0 0.0
    %342 = vmatprep.subr.mxu0 0.0
    %343 = vmatpush1.msra.mxu0 0.0
    %344 = vmatprep.subr.mxu0 0.0
    %345 = vmatpush1.msra.mxu0 0.0
    %346 = vmatprep.subr.mxu0 0.0
    %347 = vmatpush1.msra.mxu0 0.0
    %348 = vmatprep.subr.mxu0 0.0
    %349 = vmatpush1.msra.mxu0 0.0
    %350 = vmatprep.subr.mxu0 0.0
    %351 = vmatpush1.msra.mxu0 0.0
    %352 = vmatprep.mubr.f32.mxu0 0.0
    %353 = vmatmul.mubr.f32.gmra.mrb[0].mxu0 %v286
    %v354 = vpop.f32.mrb[0].mxu0
    %v355 = vadd.f32 0.0, %v354
    %v356 = vpop.f32.mrb[0].mxu0
    %357 = vdwg.mxu0
    %v359 = vrot.slane %v355, 6
    %v361 = vadd.f32 %v137, %v359
    %v362 = vmax.f32 %v361, 0.0
    %v364 = vrot.slane %v362, 2
    %366 = vmatprep.subr.mxu0 0.0
    %367 = vmatpush1.msra.mxu0 %v32
    %368 = vmatprep.subr.mxu0 0.0
    %369 = vmatpush1.msra.mxu0 %v33
    %370 = vmatprep.subr.mxu0 0.0
    %371 = vmatpush1.msra.mxu0 %v34
    %372 = vmatprep.subr.mxu0 0.0
    %373 = vmatpush1.msra.mxu0 %v35
    %374 = vmatprep.subr.mxu0 0.0
    %375 = vmatpush1.msra.mxu0 %v36
    %376 = vmatprep.subr.mxu0 0.0
    %377 = vmatpush1.msra.mxu0 %v37
    %378 = vmatprep.subr.mxu0 0.0
    %379 = vmatpush1.msra.mxu0 %v38
    %380 = vmatprep.subr.mxu0 0.0
    %381 = vmatpush1.msra.mxu0 %v39
    %382 = vmatprep.subr.mxu0 0.0
    %383 = vmatpush1.msra.mxu0 %v40
    %384 = vmatprep.subr.mxu0 0.0
    %385 = vmatpush1.msra.mxu0 %v41
    %386 = vmatprep.subr.mxu0 0.0
    %387 = vmatpush1.msra.mxu0 %v42
    %388 = vmatprep.subr.mxu0 0.0
    %389 = vmatpush1.msra.mxu0 %v43
    %390 = vmatprep.subr.mxu0 0.0
    %391 = vmatpush1.msra.mxu0 %v44
    %392 = vmatprep.subr.mxu0 0.0
    %393 = vmatpush1.msra.mxu0 %v45
    %394 = vmatprep.subr.mxu0 0.0
    %395 = vmatpush1.msra.mxu0 %v46
    %396 = vmatprep.subr.mxu0 0.0
    %397 = vmatpush1.msra.mxu0 %v47
    %398 = vmatprep.subr.mxu0 0.0
    %399 = vmatpush1.msra.mxu0 0.0
    %400 = vmatprep.subr.mxu0 0.0
    %401 = vmatpush1.msra.mxu0 0.0
    %402 = vmatprep.subr.mxu0 0.0
    %403 = vmatpush1.msra.mxu0 0.0
    %404 = vmatprep.subr.mxu0 0.0
    %405 = vmatpush1.msra.mxu0 0.0
    %406 = vmatprep.subr.mxu0 0.0
    %407 = vmatpush1.msra.mxu0 0.0
    %408 = vmatprep.subr.mxu0 0.0
    %409 = vmatpush1.msra.mxu0 0.0
    %410 = vmatprep.subr.mxu0 0.0
    %411 = vmatpush1.msra.mxu0 0.0
    %412 = vmatprep.subr.mxu0 0.0
    %413 = vmatpush1.msra.mxu0 0.0
    %414 = vmatprep.subr.mxu0 0.0
    %415 = vmatpush1.msra.mxu0 0.0
    %416 = vmatprep.subr.mxu0 0.0
    %417 = vmatpush1.msra.mxu0 0.0
    %418 = vmatprep.subr.mxu0 0.0
    %419 = vmatpush1.msra.mxu0 0.0
    %420 = vmatprep.subr.mxu0 0.0
    %421 = vmatpush1.msra.mxu0 0.0
    %422 = vmatprep.subr.mxu0 0.0
    %423 = vmatpush1.msra.mxu0 0.0
    %424 = vmatprep.subr.mxu0 0.0
    %425 = vmatpush1.msra.mxu0 0.0
    %426 = vmatprep.subr.mxu0 0.0
    %427 = vmatpush1.msra.mxu0 0.0
    %428 = vmatprep.subr.mxu0 0.0
    %429 = vmatpush1.msra.mxu0 0.0
    %430 = vmatprep.mubr.f32.mxu0 0.0
    %431 = vmatmul.mubr.f32.gmra.mrb[0].mxu0 %v364
    %v432 = vpop.f32.mrb[0].mxu0
    %v433 = vadd.f32 0.0, %v432
    %v434 = vpop.f32.mrb[0].mxu0
    %435 = vdwg.mxu0
    %v437 = vrot.slane %v433, 5
    %v439 = vadd.f32 %v137, %v437
    %v440 = vmax.f32 %v439, 0.0
    %v442 = vrot.slane %v440, 3
    %444 = vmatprep.subr.mxu0 0.0
    %445 = vmatpush1.msra.mxu0 %v32
    %446 = vmatprep.subr.mxu0 0.0
    %447 = vmatpush1.msra.mxu0 %v33
    %448 = vmatprep.subr.mxu0 0.0
    %449 = vmatpush1.msra.mxu0 %v34
    %450 = vmatprep.subr.mxu0 0.0
    %451 = vmatpush1.msra.mxu0 %v35
    %452 = vmatprep.subr.mxu0 0.0
    %453 = vmatpush1.msra.mxu0 %v36
    %454 = vmatprep.subr.mxu0 0.0
    %455 = vmatpush1.msra.mxu0 %v37
    %456 = vmatprep.subr.mxu0 0.0
    %457 = vmatpush1.msra.mxu0 %v38
    %458 = vmatprep.subr.mxu0 0.0
    %459 = vmatpush1.msra.mxu0 %v39
    %460 = vmatprep.subr.mxu0 0.0
    %461 = vmatpush1.msra.mxu0 %v40
    %462 = vmatprep.subr.mxu0 0.0
    %463 = vmatpush1.msra.mxu0 %v41
    %464 = vmatprep.subr.mxu0 0.0
    %465 = vmatpush1.msra.mxu0 %v42
    %466 = vmatprep.subr.mxu0 0.0
    %467 = vmatpush1.msra.mxu0 %v43
    %468 = vmatprep.subr.mxu0 0.0
    %469 = vmatpush1.msra.mxu0 %v44
    %470 = vmatprep.subr.mxu0 0.0
    %471 = vmatpush1.msra.mxu0 %v45
    %472 = vmatprep.subr.mxu0 0.0
    %473 = vmatpush1.msra.mxu0 %v46
    %474 = vmatprep.subr.mxu0 0.0
    %475 = vmatpush1.msra.mxu0 %v47
    %476 = vmatprep.subr.mxu0 0.0
    %477 = vmatpush1.msra.mxu0 0.0
    %478 = vmatprep.subr.mxu0 0.0
    %479 = vmatpush1.msra.mxu0 0.0
    %480 = vmatprep.subr.mxu0 0.0
    %481 = vmatpush1.msra.mxu0 0.0
    %482 = vmatprep.subr.mxu0 0.0
    %483 = vmatpush1.msra.mxu0 0.0
    %484 = vmatprep.subr.mxu0 0.0
    %485 = vmatpush1.msra.mxu0 0.0
    %486 = vmatprep.subr.mxu0 0.0
    %487 = vmatpush1.msra.mxu0 0.0
    %488 = vmatprep.subr.mxu0 0.0
    %489 = vmatpush1.msra.mxu0 0.0
    %490 = vmatprep.subr.mxu0 0.0
    %491 = vmatpush1.msra.mxu0 0.0
    %492 = vmatprep.subr.mxu0 0.0
    %493 = vmatpush1.msra.mxu0 0.0
    %494 = vmatprep.subr.mxu0 0.0
    %495 = vmatpush1.msra.mxu0 0.0
    %496 = vmatprep.subr.mxu0 0.0
    %497 = vmatpush1.msra.mxu0 0.0
    %498 = vmatprep.subr.mxu0 0.0
    %499 = vmatpush1.msra.mxu0 0.0
    %500 = vmatprep.subr.mxu0 0.0
    %501 = vmatpush1.msra.mxu0 0.0
    %502 = vmatprep.subr.mxu0 0.0
    %503 = vmatpush1.msra.mxu0 0.0
    %504 = vmatprep.subr.mxu0 0.0
    %505 = vmatpush1.msra.mxu0 0.0
    %506 = vmatprep.subr.mxu0 0.0
    %507 = vmatpush1.msra.mxu0 0.0
    %508 = vmatprep.mubr.f32.mxu0 0.0
    %509 = vmatmul.mubr.f32.gmra.mrb[0].mxu0 %v442
    %v510 = vpop.f32.mrb[0].mxu0
    %v511 = vadd.f32 0.0, %v510
    %v512 = vpop.f32.mrb[0].mxu0
    %513 = vdwg.mxu0
    %v515 = vrot.slane %v511, 4
    %v517 = vadd.f32 %v137, %v515
    %v518 = vmax.f32 %v517, 0.0
    %v520 = vrot.slane %v518, 4
    %522 = vmatprep.subr.mxu0 0.0
    %523 = vmatpush1.msra.mxu0 %v32
    %524 = vmatprep.subr.mxu0 0.0
    %525 = vmatpush1.msra.mxu0 %v33
    %526 = vmatprep.subr.mxu0 0.0
    %527 = vmatpush1.msra.mxu0 %v34
    %528 = vmatprep.subr.mxu0 0.0
    %529 = vmatpush1.msra.mxu0 %v35
    %530 = vmatprep.subr.mxu0 0.0
    %531 = vmatpush1.msra.mxu0 %v36
    %532 = vmatprep.subr.mxu0 0.0
    %533 = vmatpush1.msra.mxu0 %v37
    %534 = vmatprep.subr.mxu0 0.0
    %535 = vmatpush1.msra.mxu0 %v38
    %536 = vmatprep.subr.mxu0 0.0
    %537 = vmatpush1.msra.mxu0 %v39
    %538 = vmatprep.subr.mxu0 0.0
    %539 = vmatpush1.msra.mxu0 %v40
    %540 = vmatprep.subr.mxu0 0.0
    %541 = vmatpush1.msra.mxu0 %v41
    %542 = vmatprep.subr.mxu0 0.0
    %543 = vmatpush1.msra.mxu0 %v42
    %544 = vmatprep.subr.mxu0 0.0
    %545 = vmatpush1.msra.mxu0 %v43
    %546 = vmatprep.subr.mxu0 0.0
    %547 = vmatpush1.msra.mxu0 %v44
    %548 = vmatprep.subr.mxu0 0.0
    %549 = vmatpush1.msra.mxu0 %v45
    %550 = vmatprep.subr.mxu0 0.0
    %551 = vmatpush1.msra.mxu0 %v46
    %552 = vmatprep.subr.mxu0 0.0
    %553 = vmatpush1.msra.mxu0 %v47
    %554 = vmatprep.subr.mxu0 0.0
    %555 = vmatpush1.msra.mxu0 0.0
    %556 = vmatprep.subr.mxu0 0.0
    %557 = vmatpush1.msra.mxu0 0.0
    %558 = vmatprep.subr.mxu0 0.0
    %559 = vmatpush1.msra.mxu0 0.0
    %560 = vmatprep.subr.mxu0 0.0
    %561 = vmatpush1.msra.mxu0 0.0
    %562 = vmatprep.subr.mxu0 0.0
    %563 = vmatpush1.msra.mxu0 0.0
    %564 = vmatprep.subr.mxu0 0.0
    %565 = vmatpush1.msra.mxu0 0.0
    %566 = vmatprep.subr.mxu0 0.0
    %567 = vmatpush1.msra.mxu0 0.0
    %568 = vmatprep.subr.mxu0 0.0
    %569 = vmatpush1.msra.mxu0 0.0
    %570 = vmatprep.subr.mxu0 0.0
    %571 = vmatpush1.msra.mxu0 0.0
    %572 = vmatprep.subr.mxu0 0.0
    %573 = vmatpush1.msra.mxu0 0.0
    %574 = vmatprep.subr.mxu0 0.0
    %575 = vmatpush1.msra.mxu0 0.0
    %576 = vmatprep.subr.mxu0 0.0
    %577 = vmatpush1.msra.mxu0 0.0
    %578 = vmatprep.subr.mxu0 0.0
    %579 = vmatpush1.msra.mxu0 0.0
    %580 = vmatprep.subr.mxu0 0.0
    %581 = vmatpush1.msra.mxu0 0.0
    %582 = vmatprep.subr.mxu0 0.0
    %583 = vmatpush1.msra.mxu0 0.0
    %584 = vmatprep.subr.mxu0 0.0
    %585 = vmatpush1.msra.mxu0 0.0
    %586 = vmatprep.mubr.f32.mxu0 0.0
    %587 = vmatmul.mubr.f32.gmra.mrb[0].mxu0 %v520
    %v588 = vpop.f32.mrb[0].mxu0
    %v589 = vadd.f32 0.0, %v588
    %v590 = vpop.f32.mrb[0].mxu0
    %591 = vdwg.mxu0
    %v593 = vrot.slane %v589, 3
    %v595 = vadd.f32 %v137, %v593
    %v596 = vmax.f32 %v595, 0.0
    %v598 = vrot.slane %v596, 5
    %600 = vmatprep.subr.mxu0 0.0
    %601 = vmatpush1.msra.mxu0 %v32
    %602 = vmatprep.subr.mxu0 0.0
    %603 = vmatpush1.msra.mxu0 %v33
    %604 = vmatprep.subr.mxu0 0.0
    %605 = vmatpush1.msra.mxu0 %v34
    %606 = vmatprep.subr.mxu0 0.0
    %607 = vmatpush1.msra.mxu0 %v35
    %608 = vmatprep.subr.mxu0 0.0
    %609 = vmatpush1.msra.mxu0 %v36
    %610 = vmatprep.subr.mxu0 0.0
    %611 = vmatpush1.msra.mxu0 %v37
    %612 = vmatprep.subr.mxu0 0.0
    %613 = vmatpush1.msra.mxu0 %v38
    %614 = vmatprep.subr.mxu0 0.0
    %615 = vmatpush1.msra.mxu0 %v39
    %616 = vmatprep.subr.mxu0 0.0
    %617 = vmatpush1.msra.mxu0 %v40
    %618 = vmatprep.subr.mxu0 0.0
    %619 = vmatpush1.msra.mxu0 %v41
    %620 = vmatprep.subr.mxu0 0.0
    %621 = vmatpush1.msra.mxu0 %v42
    %622 = vmatprep.subr.mxu0 0.0
    %623 = vmatpush1.msra.mxu0 %v43
    %624 = vmatprep.subr.mxu0 0.0
    %625 = vmatpush1.msra.mxu0 %v44
    %626 = vmatprep.subr.mxu0 0.0
    %627 = vmatpush1.msra.mxu0 %v45
    %628 = vmatprep.subr.mxu0 0.0
    %629 = vmatpush1.msra.mxu0 %v46
    %630 = vmatprep.subr.mxu0 0.0
    %631 = vmatpush1.msra.mxu0 %v47
    %632 = vmatprep.subr.mxu0 0.0
    %633 = vmatpush1.msra.mxu0 0.0
    %634 = vmatprep.subr.mxu0 0.0
    %635 = vmatpush1.msra.mxu0 0.0
    %636 = vmatprep.subr.mxu0 0.0
    %637 = vmatpush1.msra.mxu0 0.0
    %638 = vmatprep.subr.mxu0 0.0
    %639 = vmatpush1.msra.mxu0 0.0
    %640 = vmatprep.subr.mxu0 0.0
    %641 = vmatpush1.msra.mxu0 0.0
    %642 = vmatprep.subr.mxu0 0.0
    %643 = vmatpush1.msra.mxu0 0.0
    %644 = vmatprep.subr.mxu0 0.0
    %645 = vmatpush1.msra.mxu0 0.0
    %646 = vmatprep.subr.mxu0 0.0
    %647 = vmatpush1.msra.mxu0 0.0
    %648 = vmatprep.subr.mxu0 0.0
    %649 = vmatpush1.msra.mxu0 0.0
    %650 = vmatprep.subr.mxu0 0.0
    %651 = vmatpush1.msra.mxu0 0.0
    %652 = vmatprep.subr.mxu0 0.0
    %653 = vmatpush1.msra.mxu0 0.0
    %654 = vmatprep.subr.mxu0 0.0
    %655 = vmatpush1.msra.mxu0 0.0
    %656 = vmatprep.subr.mxu0 0.0
    %657 = vmatpush1.msra.mxu0 0.0
    %658 = vmatprep.subr.mxu0 0.0
    %659 = vmatpush1.msra.mxu0 0.0
    %660 = vmatprep.subr.mxu0 0.0
    %661 = vmatpush1.msra.mxu0 0.0
    %662 = vmatprep.subr.mxu0 0.0
    %663 = vmatpush1.msra.mxu0 0.0
    %664 = vmatprep.mubr.f32.mxu0 0.0
    %665 = vmatmul.mubr.f32.gmra.mrb[0].mxu0 %v598
    %v666 = vpop.f32.mrb[0].mxu0
    %v667 = vadd.f32 0.0, %v666
    %v668 = vpop.f32.mrb[0].mxu0
    %669 = vdwg.mxu0
    %v671 = vrot.slane %v667, 2
    %v673 = vadd.f32 %v137, %v671
    %v674 = vmax.f32 %v673, 0.0
    %v676 = vrot.slane %v674, 6
    %678 = vmatprep.subr.mxu0 0.0
    %679 = vmatpush1.msra.mxu0 %v32
    %680 = vmatprep.subr.mxu0 0.0
    %681 = vmatpush1.msra.mxu0 %v33
    %682 = vmatprep.subr.mxu0 0.0
    %683 = vmatpush1.msra.mxu0 %v34
    %684 = vmatprep.subr.mxu0 0.0
    %685 = vmatpush1.msra.mxu0 %v35
    %686 = vmatprep.subr.mxu0 0.0
    %687 = vmatpush1.msra.mxu0 %v36
    %688 = vmatprep.subr.mxu0 0.0
    %689 = vmatpush1.msra.mxu0 %v37
    %690 = vmatprep.subr.mxu0 0.0
    %691 = vmatpush1.msra.mxu0 %v38
    %692 = vmatprep.subr.mxu0 0.0
    %693 = vmatpush1.msra.mxu0 %v39
    %694 = vmatprep.subr.mxu0 0.0
    %695 = vmatpush1.msra.mxu0 %v40
    %696 = vmatprep.subr.mxu0 0.0
    %697 = vmatpush1.msra.mxu0 %v41
    %698 = vmatprep.subr.mxu0 0.0
    %699 = vmatpush1.msra.mxu0 %v42
    %700 = vmatprep.subr.mxu0 0.0
    %701 = vmatpush1.msra.mxu0 %v43
    %702 = vmatprep.subr.mxu0 0.0
    %703 = vmatpush1.msra.mxu0 %v44
    %704 = vmatprep.subr.mxu0 0.0
    %705 = vmatpush1.msra.mxu0 %v45
    %706 = vmatprep.subr.mxu0 0.0
    %707 = vmatpush1.msra.mxu0 %v46
    %708 = vmatprep.subr.mxu0 0.0
    %709 = vmatpush1.msra.mxu0 %v47
    %710 = vmatprep.subr.mxu0 0.0
    %711 = vmatpush1.msra.mxu0 0.0
    %712 = vmatprep.subr.mxu0 0.0
    %713 = vmatpush1.msra.mxu0 0.0
    %714 = vmatprep.subr.mxu0 0.0
    %715 = vmatpush1.msra.mxu0 0.0
    %716 = vmatprep.subr.mxu0 0.0
    %717 = vmatpush1.msra.mxu0 0.0
    %718 = vmatprep.subr.mxu0 0.0
    %719 = vmatpush1.msra.mxu0 0.0
    %720 = vmatprep.subr.mxu0 0.0
    %721 = vmatpush1.msra.mxu0 0.0
    %722 = vmatprep.subr.mxu0 0.0
    %723 = vmatpush1.msra.mxu0 0.0
    %724 = vmatprep.subr.mxu0 0.0
    %725 = vmatpush1.msra.mxu0 0.0
    %726 = vmatprep.subr.mxu0 0.0
    %727 = vmatpush1.msra.mxu0 0.0
    %728 = vmatprep.subr.mxu0 0.0
    %729 = vmatpush1.msra.mxu0 0.0
    %730 = vmatprep.subr.mxu0 0.0
    %731 = vmatpush1.msra.mxu0 0.0
    %732 = vmatprep.subr.mxu0 0.0
    %733 = vmatpush1.msra.mxu0 0.0
    %734 = vmatprep.subr.mxu0 0.0
    %735 = vmatpush1.msra.mxu0 0.0
    %736 = vmatprep.subr.mxu0 0.0
    %737 = vmatpush1.msra.mxu0 0.0
    %738 = vmatprep.subr.mxu0 0.0
    %739 = vmatpush1.msra.mxu0 0.0
    %740 = vmatprep.subr.mxu0 0.0
    %741 = vmatpush1.msra.mxu0 0.0
    %742 = vmatprep.mubr.f32.mxu0 0.0
    %743 = vmatmul.mubr.f32.gmra.mrb[0].mxu0 %v676
    %v744 = vpop.f32.mrb[0].mxu0
    %v745 = vadd.f32 0.0, %v744
    %v746 = vpop.f32.mrb[0].mxu0
    %747 = vdwg.mxu0
    %v749 = vrot.slane %v745, 1
    %v751 = vadd.f32 %v137, %v749
    %v752 = vmax.f32 %v751, 0.0
    %vm753 = vcmask 1040384
    %v754 = vsel %vm753, %v209, %v284
    %vm755 = vcmask 1041408
    %v756 = vsel %vm755, %v754, %v362
    %vm757 = vcmask 1042432
    %v758 = vsel %vm757, %v756, %v440
    %vm759 = vcmask 1043456
    %v760 = vsel %vm759, %v758, %v518
    %vm761 = vcmask 1044480
    %v762 = vsel %vm761, %v760, %v596
    %vm763 = vcmask 1045504
    %v764 = vsel %vm763, %v762, %v674
    %vm765 = vcmask 1046528
    %v766 = vsel %vm765, %v764, %v752
    %767 = vst [vmem:[#allocation3] sm:$0xff] %v766
    %768 = vst [vmem:[%s7 - $0x7] sm:$0x80] %v752
  $region33: #{two_feature_rnn_forward.1} parent=0 // pred_fallthru
    _
  %p769 = scmp.lt.s32.totalorder %s31, 8
  // Predicated region
  $region34: #{two_feature_rnn_forward.1} parent=0 // pred_check
    %p770 = pneg %p769
  $region35: #{two_feature_rnn_forward.1} parent=0 // pred_check_branch
    %772 = sbr.rel (%p770) target = $region37
  $region36: #{two_feature_rnn_forward.1} parent=0 // pred_region
    %v773 = vld [vmem:[#allocation2] sm:$0xff]
    %774 = vmatprep.subr.mxu0 0.0
    %775 = vmatpush1.msra.mxu0 %v32
    %776 = vmatprep.subr.mxu0 0.0
    %777 = vmatpush1.msra.mxu0 %v33
    %778 = vmatprep.subr.mxu0 0.0
    %779 = vmatpush1.msra.mxu0 %v34
    %780 = vmatprep.subr.mxu0 0.0
    %781 = vmatpush1.msra.mxu0 %v35
    %782 = vmatprep.subr.mxu0 0.0
    %783 = vmatpush1.msra.mxu0 %v36
    %784 = vmatprep.subr.mxu0 0.0
    %785 = vmatpush1.msra.mxu0 %v37
    %786 = vmatprep.subr.mxu0 0.0
    %787 = vmatpush1.msra.mxu0 %v38
    %788 = vmatprep.subr.mxu0 0.0
    %789 = vmatpush1.msra.mxu0 %v39
    %790 = vmatprep.subr.mxu0 0.0
    %791 = vmatpush1.msra.mxu0 %v40
    %792 = vmatprep.subr.mxu0 0.0
    %793 = vmatpush1.msra.mxu0 %v41
    %794 = vmatprep.subr.mxu0 0.0
    %795 = vmatpush1.msra.mxu0 %v42
    %796 = vmatprep.subr.mxu0 0.0
    %797 = vmatpush1.msra.mxu0 %v43
    %798 = vmatprep.subr.mxu0 0.0
    %799 = vmatpush1.msra.mxu0 %v44
    %800 = vmatprep.subr.mxu0 0.0
    %801 = vmatpush1.msra.mxu0 %v45
    %802 = vmatprep.subr.mxu0 0.0
    %803 = vmatpush1.msra.mxu0 %v46
    %804 = vmatprep.subr.mxu0 0.0
    %805 = vmatpush1.msra.mxu0 %v47
    %806 = vmatprep.subr.mxu0 0.0
    %807 = vmatpush1.msra.mxu0 0.0
    %808 = vmatprep.subr.mxu0 0.0
    %809 = vmatpush1.msra.mxu0 0.0
    %810 = vmatprep.subr.mxu0 0.0
    %811 = vmatpush1.msra.mxu0 0.0
    %812 = vmatprep.subr.mxu0 0.0
    %813 = vmatpush1.msra.mxu0 0.0
    %814 = vmatprep.subr.mxu0 0.0
    %815 = vmatpush1.msra.mxu0 0.0
    %816 = vmatprep.subr.mxu0 0.0
    %817 = vmatpush1.msra.mxu0 0.0
    %818 = vmatprep.subr.mxu0 0.0
    %819 = vmatpush1.msra.mxu0 0.0
    %820 = vmatprep.subr.mxu0 0.0
    %821 = vmatpush1.msra.mxu0 0.0
    %822 = vmatprep.subr.mxu0 0.0
    %823 = vmatpush1.msra.mxu0 0.0
    %824 = vmatprep.subr.mxu0 0.0
    %825 = vmatpush1.msra.mxu0 0.0
    %826 = vmatprep.subr.mxu0 0.0
    %827 = vmatpush1.msra.mxu0 0.0
    %828 = vmatprep.subr.mxu0 0.0
    %829 = vmatpush1.msra.mxu0 0.0
    %830 = vmatprep.subr.mxu0 0.0
    %831 = vmatpush1.msra.mxu0 0.0
    %832 = vmatprep.subr.mxu0 0.0
    %833 = vmatpush1.msra.mxu0 0.0
    %834 = vmatprep.subr.mxu0 0.0
    %835 = vmatpush1.msra.mxu0 0.0
    %836 = vmatprep.subr.mxu0 0.0
    %837 = vmatpush1.msra.mxu0 0.0
    %838 = vmatprep.mubr.f32.mxu0 0.0
    %839 = vmatmul.mubr.f32.gmra.mrb[0].mxu0 %v132
    %v840 = vpop.f32.mrb[0].mxu0
    %v841 = vadd.f32 0.0, %v840
    %v842 = vpop.f32.mrb[0].mxu0
    %843 = vdwg.mxu0
    %v844 = vadd.f32 %v773, %v841
    %v845 = vmax.f32 %v844, 0.0
    %p846 = scmp.lt.s32.totalorder 0, %s31
    %s847 = scalar_select %p846, 1, 0
    %v848 = vstv %s847
    %vm849 = vcmp.eq.s32.totalorder %v848, 1
    %v850 = vsel %vm849, %v845, %v132
    %851 = vmatprep.subr.mxu0 0.0
    %852 = vmatpush1.msra.mxu0 %v32
    %853 = vmatprep.subr.mxu0 0.0
    %854 = vmatpush1.msra.mxu0 %v33
    %855 = vmatprep.subr.mxu0 0.0
    %856 = vmatpush1.msra.mxu0 %v34
    %857 = vmatprep.subr.mxu0 0.0
    %858 = vmatpush1.msra.mxu0 %v35
    %859 = vmatprep.subr.mxu0 0.0
    %860 = vmatpush1.msra.mxu0 %v36
    %861 = vmatprep.subr.mxu0 0.0
    %862 = vmatpush1.msra.mxu0 %v37
    %863 = vmatprep.subr.mxu0 0.0
    %864 = vmatpush1.msra.mxu0 %v38
    %865 = vmatprep.subr.mxu0 0.0
    %866 = vmatpush1.msra.mxu0 %v39
    %867 = vmatprep.subr.mxu0 0.0
    %868 = vmatpush1.msra.mxu0 %v40
    %869 = vmatprep.subr.mxu0 0.0
    %870 = vmatpush1.msra.mxu0 %v41
    %871 = vmatprep.subr.mxu0 0.0
    %872 = vmatpush1.msra.mxu0 %v42
    %873 = vmatprep.subr.mxu0 0.0
    %874 = vmatpush1.msra.mxu0 %v43
    %875 = vmatprep.subr.mxu0 0.0
    %876 = vmatpush1.msra.mxu0 %v44
    %877 = vmatprep.subr.mxu0 0.0
    %878 = vmatpush1.msra.mxu0 %v45
    %879 = vmatprep.subr.mxu0 0.0
    %880 = vmatpush1.msra.mxu0 %v46
    %881 = vmatprep.subr.mxu0 0.0
    %882 = vmatpush1.msra.mxu0 %v47
    %883 = vmatprep.subr.mxu0 0.0
    %884 = vmatpush1.msra.mxu0 0.0
    %885 = vmatprep.subr.mxu0 0.0
    %886 = vmatpush1.msra.mxu0 0.0
    %887 = vmatprep.subr.mxu0 0.0
    %888 = vmatpush1.msra.mxu0 0.0
    %889 = vmatprep.subr.mxu0 0.0
    %890 = vmatpush1.msra.mxu0 0.0
    %891 = vmatprep.subr.mxu0 0.0
    %892 = vmatpush1.msra.mxu0 0.0
    %893 = vmatprep.subr.mxu0 0.0
    %894 = vmatpush1.msra.mxu0 0.0
    %895 = vmatprep.subr.mxu0 0.0
    %896 = vmatpush1.msra.mxu0 0.0
    %897 = vmatprep.subr.mxu0 0.0
    %898 = vmatpush1.msra.mxu0 0.0
    %899 = vmatprep.subr.mxu0 0.0
    %900 = vmatpush1.msra.mxu0 0.0
    %901 = vmatprep.subr.mxu0 0.0
    %902 = vmatpush1.msra.mxu0 0.0
    %903 = vmatprep.subr.mxu0 0.0
    %904 = vmatpush1.msra.mxu0 0.0
    %905 = vmatprep.subr.mxu0 0.0
    %906 = vmatpush1.msra.mxu0 0.0
    %907 = vmatprep.subr.mxu0 0.0
    %908 = vmatpush1.msra.mxu0 0.0
    %909 = vmatprep.subr.mxu0 0.0
    %910 = vmatpush1.msra.mxu0 0.0
    %911 = vmatprep.subr.mxu0 0.0
    %912 = vmatpush1.msra.mxu0 0.0
    %913 = vmatprep.subr.mxu0 0.0
    %914 = vmatpush1.msra.mxu0 0.0
    %915 = vmatprep.mubr.f32.mxu0 0.0
    %916 = vmatmul.mubr.f32.gmra.mrb[0].mxu0 %v850
    %v917 = vpop.f32.mrb[0].mxu0
    %v918 = vadd.f32 0.0, %v917
    %v919 = vpop.f32.mrb[0].mxu0
    %920 = vdwg.mxu0
    %v922 = vrot.slane %v918, 7
    %v924 = vadd.f32 %v773, %v922
    %v925 = vmax.f32 %v924, 0.0
    %s926 = sadd.s32 0, 1
    %p927 = scmp.lt.s32.totalorder %s926, %s31
    %s928 = scalar_select %p927, 1, 0
    %v929 = vstv %s928
    %vm930 = vcmp.eq.s32.totalorder %v929, 1
    %v932 = vrot.slane %v850, 7
    %v934 = vsel %vm930, %v925, %v932
    %v936 = vrot.slane %v934, 1
    %938 = vmatprep.subr.mxu0 0.0
    %939 = vmatpush1.msra.mxu0 %v32
    %940 = vmatprep.subr.mxu0 0.0
    %941 = vmatpush1.msra.mxu0 %v33
    %942 = vmatprep.subr.mxu0 0.0
    %943 = vmatpush1.msra.mxu0 %v34
    %944 = vmatprep.subr.mxu0 0.0
    %945 = vmatpush1.msra.mxu0 %v35
    %946 = vmatprep.subr.mxu0 0.0
    %947 = vmatpush1.msra.mxu0 %v36
    %948 = vmatprep.subr.mxu0 0.0
    %949 = vmatpush1.msra.mxu0 %v37
    %950 = vmatprep.subr.mxu0 0.0
    %951 = vmatpush1.msra.mxu0 %v38
    %952 = vmatprep.subr.mxu0 0.0
    %953 = vmatpush1.msra.mxu0 %v39
    %954 = vmatprep.subr.mxu0 0.0
    %955 = vmatpush1.msra.mxu0 %v40
    %956 = vmatprep.subr.mxu0 0.0
    %957 = vmatpush1.msra.mxu0 %v41
    %958 = vmatprep.subr.mxu0 0.0
    %959 = vmatpush1.msra.mxu0 %v42
    %960 = vmatprep.subr.mxu0 0.0
    %961 = vmatpush1.msra.mxu0 %v43
    %962 = vmatprep.subr.mxu0 0.0
    %963 = vmatpush1.msra.mxu0 %v44
    %964 = vmatprep.subr.mxu0 0.0
    %965 = vmatpush1.msra.mxu0 %v45
    %966 = vmatprep.subr.mxu0 0.0
    %967 = vmatpush1.msra.mxu0 %v46
    %968 = vmatprep.subr.mxu0 0.0
    %969 = vmatpush1.msra.mxu0 %v47
    %970 = vmatprep.subr.mxu0 0.0
    %971 = vmatpush1.msra.mxu0 0.0
    %972 = vmatprep.subr.mxu0 0.0
    %973 = vmatpush1.msra.mxu0 0.0
    %974 = vmatprep.subr.mxu0 0.0
    %975 = vmatpush1.msra.mxu0 0.0
    %976 = vmatprep.subr.mxu0 0.0
    %977 = vmatpush1.msra.mxu0 0.0
    %978 = vmatprep.subr.mxu0 0.0
    %979 = vmatpush1.msra.mxu0 0.0
    %980 = vmatprep.subr.mxu0 0.0
    %981 = vmatpush1.msra.mxu0 0.0
    %982 = vmatprep.subr.mxu0 0.0
    %983 = vmatpush1.msra.mxu0 0.0
    %984 = vmatprep.subr.mxu0 0.0
    %985 = vmatpush1.msra.mxu0 0.0
    %986 = vmatprep.subr.mxu0 0.0
    %987 = vmatpush1.msra.mxu0 0.0
    %988 = vmatprep.subr.mxu0 0.0
    %989 = vmatpush1.msra.mxu0 0.0
    %990 = vmatprep.subr.mxu0 0.0
    %991 = vmatpush1.msra.mxu0 0.0
    %992 = vmatprep.subr.mxu0 0.0
    %993 = vmatpush1.msra.mxu0 0.0
    %994 = vmatprep.subr.mxu0 0.0
    %995 = vmatpush1.msra.mxu0 0.0
    %996 = vmatprep.subr.mxu0 0.0
    %997 = vmatpush1.msra.mxu0 0.0
    %998 = vmatprep.subr.mxu0 0.0
    %999 = vmatpush1.msra.mxu0 0.0
    %1000 = vmatprep.subr.mxu0 0.0
    %1001 = vmatpush1.msra.mxu0 0.0
    %1002 = vmatprep.mubr.f32.mxu0 0.0
    %1003 = vmatmul.mubr.f32.gmra.mrb[0].mxu0 %v936
    %v1004 = vpop.f32.mrb[0].mxu0
    %v1005 = vadd.f32 0.0, %v1004
    %v1006 = vpop.f32.mrb[0].mxu0
    %1007 = vdwg.mxu0
    %v1009 = vrot.slane %v1005, 6
    %v1011 = vadd.f32 %v773, %v1009
    %v1012 = vmax.f32 %v1011, 0.0
    %s1013 = sadd.s32 0, 2
    %p1014 = scmp.lt.s32.totalorder %s1013, %s31
    %s1015 = scalar_select %p1014, 1, 0
    %v1016 = vstv %s1015
    %vm1017 = vcmp.eq.s32.totalorder %v1016, 1
    %v1018 = vrot.slane %v934, 7
    %v1020 = vsel %vm1017, %v1012, %v1018
    %v1022 = vrot.slane %v1020, 2
    %1024 = vmatprep.subr.mxu0 0.0
    %1025 = vmatpush1.msra.mxu0 %v32
    %1026 = vmatprep.subr.mxu0 0.0
    %1027 = vmatpush1.msra.mxu0 %v33
    %1028 = vmatprep.subr.mxu0 0.0
    %1029 = vmatpush1.msra.mxu0 %v34
    %1030 = vmatprep.subr.mxu0 0.0
    %1031 = vmatpush1.msra.mxu0 %v35
    %1032 = vmatprep.subr.mxu0 0.0
    %1033 = vmatpush1.msra.mxu0 %v36
    %1034 = vmatprep.subr.mxu0 0.0
    %1035 = vmatpush1.msra.mxu0 %v37
    %1036 = vmatprep.subr.mxu0 0.0
    %1037 = vmatpush1.msra.mxu0 %v38
    %1038 = vmatprep.subr.mxu0 0.0
    %1039 = vmatpush1.msra.mxu0 %v39
    %1040 = vmatprep.subr.mxu0 0.0
    %1041 = vmatpush1.msra.mxu0 %v40
    %1042 = vmatprep.subr.mxu0 0.0
    %1043 = vmatpush1.msra.mxu0 %v41
    %1044 = vmatprep.subr.mxu0 0.0
    %1045 = vmatpush1.msra.mxu0 %v42
    %1046 = vmatprep.subr.mxu0 0.0
    %1047 = vmatpush1.msra.mxu0 %v43
    %1048 = vmatprep.subr.mxu0 0.0
    %1049 = vmatpush1.msra.mxu0 %v44
    %1050 = vmatprep.subr.mxu0 0.0
    %1051 = vmatpush1.msra.mxu0 %v45
    %1052 = vmatprep.subr.mxu0 0.0
    %1053 = vmatpush1.msra.mxu0 %v46
    %1054 = vmatprep.subr.mxu0 0.0
    %1055 = vmatpush1.msra.mxu0 %v47
    %1056 = vmatprep.subr.mxu0 0.0
    %1057 = vmatpush1.msra.mxu0 0.0
    %1058 = vmatprep.subr.mxu0 0.0
    %1059 = vmatpush1.msra.mxu0 0.0
    %1060 = vmatprep.subr.mxu0 0.0
    %1061 = vmatpush1.msra.mxu0 0.0
    %1062 = vmatprep.subr.mxu0 0.0
    %1063 = vmatpush1.msra.mxu0 0.0
    %1064 = vmatprep.subr.mxu0 0.0
    %1065 = vmatpush1.msra.mxu0 0.0
    %1066 = vmatprep.subr.mxu0 0.0
    %1067 = vmatpush1.msra.mxu0 0.0
    %1068 = vmatprep.subr.mxu0 0.0
    %1069 = vmatpush1.msra.mxu0 0.0
    %1070 = vmatprep.subr.mxu0 0.0
    %1071 = vmatpush1.msra.mxu0 0.0
    %1072 = vmatprep.subr.mxu0 0.0
    %1073 = vmatpush1.msra.mxu0 0.0
    %1074 = vmatprep.subr.mxu0 0.0
    %1075 = vmatpush1.msra.mxu0 0.0
    %1076 = vmatprep.subr.mxu0 0.0
    %1077 = vmatpush1.msra.mxu0 0.0
    %1078 = vmatprep.subr.mxu0 0.0
    %1079 = vmatpush1.msra.mxu0 0.0
    %1080 = vmatprep.subr.mxu0 0.0
    %1081 = vmatpush1.msra.mxu0 0.0
    %1082 = vmatprep.subr.mxu0 0.0
    %1083 = vmatpush1.msra.mxu0 0.0
    %1084 = vmatprep.subr.mxu0 0.0
    %1085 = vmatpush1.msra.mxu0 0.0
    %1086 = vmatprep.subr.mxu0 0.0
    %1087 = vmatpush1.msra.mxu0 0.0
    %1088 = vmatprep.mubr.f32.mxu0 0.0
    %1089 = vmatmul.mubr.f32.gmra.mrb[0].mxu0 %v1022
    %v1090 = vpop.f32.mrb[0].mxu0
    %v1091 = vadd.f32 0.0, %v1090
    %v1092 = vpop.f32.mrb[0].mxu0
    %1093 = vdwg.mxu0
    %v1095 = vrot.slane %v1091, 5
    %v1097 = vadd.f32 %v773, %v1095
    %v1098 = vmax.f32 %v1097, 0.0
    %s1099 = sadd.s32 0, 3
    %p1100 = scmp.lt.s32.totalorder %s1099, %s31
    %s1101 = scalar_select %p1100, 1, 0
    %v1102 = vstv %s1101
    %vm1103 = vcmp.eq.s32.totalorder %v1102, 1
    %v1104 = vrot.slane %v1020, 7
    %v1106 = vsel %vm1103, %v1098, %v1104
    %v1108 = vrot.slane %v1106, 3
    %1110 = vmatprep.subr.mxu0 0.0
    %1111 = vmatpush1.msra.mxu0 %v32
    %1112 = vmatprep.subr.mxu0 0.0
    %1113 = vmatpush1.msra.mxu0 %v33
    %1114 = vmatprep.subr.mxu0 0.0
    %1115 = vmatpush1.msra.mxu0 %v34
    %1116 = vmatprep.subr.mxu0 0.0
    %1117 = vmatpush1.msra.mxu0 %v35
    %1118 = vmatprep.subr.mxu0 0.0
    %1119 = vmatpush1.msra.mxu0 %v36
    %1120 = vmatprep.subr.mxu0 0.0
    %1121 = vmatpush1.msra.mxu0 %v37
    %1122 = vmatprep.subr.mxu0 0.0
    %1123 = vmatpush1.msra.mxu0 %v38
    %1124 = vmatprep.subr.mxu0 0.0
    %1125 = vmatpush1.msra.mxu0 %v39
    %1126 = vmatprep.subr.mxu0 0.0
    %1127 = vmatpush1.msra.mxu0 %v40
    %1128 = vmatprep.subr.mxu0 0.0
    %1129 = vmatpush1.msra.mxu0 %v41
    %1130 = vmatprep.subr.mxu0 0.0
    %1131 = vmatpush1.msra.mxu0 %v42
    %1132 = vmatprep.subr.mxu0 0.0
    %1133 = vmatpush1.msra.mxu0 %v43
    %1134 = vmatprep.subr.mxu0 0.0
    %1135 = vmatpush1.msra.mxu0 %v44
    %1136 = vmatprep.subr.mxu0 0.0
    %1137 = vmatpush1.msra.mxu0 %v45
    %1138 = vmatprep.subr.mxu0 0.0
    %1139 = vmatpush1.msra.mxu0 %v46
    %1140 = vmatprep.subr.mxu0 0.0
    %1141 = vmatpush1.msra.mxu0 %v47
    %1142 = vmatprep.subr.mxu0 0.0
    %1143 = vmatpush1.msra.mxu0 0.0
    %1144 = vmatprep.subr.mxu0 0.0
    %1145 = vmatpush1.msra.mxu0 0.0
    %1146 = vmatprep.subr.mxu0 0.0
    %1147 = vmatpush1.msra.mxu0 0.0
    %1148 = vmatprep.subr.mxu0 0.0
    %1149 = vmatpush1.msra.mxu0 0.0
    %1150 = vmatprep.subr.mxu0 0.0
    %1151 = vmatpush1.msra.mxu0 0.0
    %1152 = vmatprep.subr.mxu0 0.0
    %1153 = vmatpush1.msra.mxu0 0.0
    %1154 = vmatprep.subr.mxu0 0.0
    %1155 = vmatpush1.msra.mxu0 0.0
    %1156 = vmatprep.subr.mxu0 0.0
    %1157 = vmatpush1.msra.mxu0 0.0
    %1158 = vmatprep.subr.mxu0 0.0
    %1159 = vmatpush1.msra.mxu0 0.0
    %1160 = vmatprep.subr.mxu0 0.0
    %1161 = vmatpush1.msra.mxu0 0.0
    %1162 = vmatprep.subr.mxu0 0.0
    %1163 = vmatpush1.msra.mxu0 0.0
    %1164 = vmatprep.subr.mxu0 0.0
    %1165 = vmatpush1.msra.mxu0 0.0
    %1166 = vmatprep.subr.mxu0 0.0
    %1167 = vmatpush1.msra.mxu0 0.0
    %1168 = vmatprep.subr.mxu0 0.0
    %1169 = vmatpush1.msra.mxu0 0.0
    %1170 = vmatprep.subr.mxu0 0.0
    %1171 = vmatpush1.msra.mxu0 0.0
    %1172 = vmatprep.subr.mxu0 0.0
    %1173 = vmatpush1.msra.mxu0 0.0
    %1174 = vmatprep.mubr.f32.mxu0 0.0
    %1175 = vmatmul.mubr.f32.gmra.mrb[0].mxu0 %v1108
    %v1176 = vpop.f32.mrb[0].mxu0
    %v1177 = vadd.f32 0.0, %v1176
    %v1178 = vpop.f32.mrb[0].mxu0
    %1179 = vdwg.mxu0
    %v1181 = vrot.slane %v1177, 4
    %v1183 = vadd.f32 %v773, %v1181
    %v1184 = vmax.f32 %v1183, 0.0
    %s1185 = sadd.s32 0, 4
    %p1186 = scmp.lt.s32.totalorder %s1185, %s31
    %s1187 = scalar_select %p1186, 1, 0
    %v1188 = vstv %s1187
    %vm1189 = vcmp.eq.s32.totalorder %v1188, 1
    %v1190 = vrot.slane %v1106, 7
    %v1192 = vsel %vm1189, %v1184, %v1190
    %v1194 = vrot.slane %v1192, 4
    %1196 = vmatprep.subr.mxu0 0.0
    %1197 = vmatpush1.msra.mxu0 %v32
    %1198 = vmatprep.subr.mxu0 0.0
    %1199 = vmatpush1.msra.mxu0 %v33
    %1200 = vmatprep.subr.mxu0 0.0
    %1201 = vmatpush1.msra.mxu0 %v34
    %1202 = vmatprep.subr.mxu0 0.0
    %1203 = vmatpush1.msra.mxu0 %v35
    %1204 = vmatprep.subr.mxu0 0.0
    %1205 = vmatpush1.msra.mxu0 %v36
    %1206 = vmatprep.subr.mxu0 0.0
    %1207 = vmatpush1.msra.mxu0 %v37
    %1208 = vmatprep.subr.mxu0 0.0
    %1209 = vmatpush1.msra.mxu0 %v38
    %1210 = vmatprep.subr.mxu0 0.0
    %1211 = vmatpush1.msra.mxu0 %v39
    %1212 = vmatprep.subr.mxu0 0.0
    %1213 = vmatpush1.msra.mxu0 %v40
    %1214 = vmatprep.subr.mxu0 0.0
    %1215 = vmatpush1.msra.mxu0 %v41
    %1216 = vmatprep.subr.mxu0 0.0
    %1217 = vmatpush1.msra.mxu0 %v42
    %1218 = vmatprep.subr.mxu0 0.0
    %1219 = vmatpush1.msra.mxu0 %v43
    %1220 = vmatprep.subr.mxu0 0.0
    %1221 = vmatpush1.msra.mxu0 %v44
    %1222 = vmatprep.subr.mxu0 0.0
    %1223 = vmatpush1.msra.mxu0 %v45
    %1224 = vmatprep.subr.mxu0 0.0
    %1225 = vmatpush1.msra.mxu0 %v46
    %1226 = vmatprep.subr.mxu0 0.0
    %1227 = vmatpush1.msra.mxu0 %v47
    %1228 = vmatprep.subr.mxu0 0.0
    %1229 = vmatpush1.msra.mxu0 0.0
    %1230 = vmatprep.subr.mxu0 0.0
    %1231 = vmatpush1.msra.mxu0 0.0
    %1232 = vmatprep.subr.mxu0 0.0
    %1233 = vmatpush1.msra.mxu0 0.0
    %1234 = vmatprep.subr.mxu0 0.0
    %1235 = vmatpush1.msra.mxu0 0.0
    %1236 = vmatprep.subr.mxu0 0.0
    %1237 = vmatpush1.msra.mxu0 0.0
    %1238 = vmatprep.subr.mxu0 0.0
    %1239 = vmatpush1.msra.mxu0 0.0
    %1240 = vmatprep.subr.mxu0 0.0
    %1241 = vmatpush1.msra.mxu0 0.0
    %1242 = vmatprep.subr.mxu0 0.0
    %1243 = vmatpush1.msra.mxu0 0.0
    %1244 = vmatprep.subr.mxu0 0.0
    %1245 = vmatpush1.msra.mxu0 0.0
    %1246 = vmatprep.subr.mxu0 0.0
    %1247 = vmatpush1.msra.mxu0 0.0
    %1248 = vmatprep.subr.mxu0 0.0
    %1249 = vmatpush1.msra.mxu0 0.0
    %1250 = vmatprep.subr.mxu0 0.0
    %1251 = vmatpush1.msra.mxu0 0.0
    %1252 = vmatprep.subr.mxu0 0.0
    %1253 = vmatpush1.msra.mxu0 0.0
    %1254 = vmatprep.subr.mxu0 0.0
    %1255 = vmatpush1.msra.mxu0 0.0
    %1256 = vmatprep.subr.mxu0 0.0
    %1257 = vmatpush1.msra.mxu0 0.0
    %1258 = vmatprep.subr.mxu0 0.0
    %1259 = vmatpush1.msra.mxu0 0.0
    %1260 = vmatprep.mubr.f32.mxu0 0.0
    %1261 = vmatmul.mubr.f32.gmra.mrb[0].mxu0 %v1194
    %v1262 = vpop.f32.mrb[0].mxu0
    %v1263 = vadd.f32 0.0, %v1262
    %v1264 = vpop.f32.mrb[0].mxu0
    %1265 = vdwg.mxu0
    %v1267 = vrot.slane %v1263, 3
    %v1269 = vadd.f32 %v773, %v1267
    %v1270 = vmax.f32 %v1269, 0.0
    %s1271 = sadd.s32 0, 5
    %p1272 = scmp.lt.s32.totalorder %s1271, %s31
    %s1273 = scalar_select %p1272, 1, 0
    %v1274 = vstv %s1273
    %vm1275 = vcmp.eq.s32.totalorder %v1274, 1
    %v1276 = vrot.slane %v1192, 7
    %v1278 = vsel %vm1275, %v1270, %v1276
    %v1280 = vrot.slane %v1278, 5
    %1282 = vmatprep.subr.mxu0 0.0
    %1283 = vmatpush1.msra.mxu0 %v32
    %1284 = vmatprep.subr.mxu0 0.0
    %1285 = vmatpush1.msra.mxu0 %v33
    %1286 = vmatprep.subr.mxu0 0.0
    %1287 = vmatpush1.msra.mxu0 %v34
    %1288 = vmatprep.subr.mxu0 0.0
    %1289 = vmatpush1.msra.mxu0 %v35
    %1290 = vmatprep.subr.mxu0 0.0
    %1291 = vmatpush1.msra.mxu0 %v36
    %1292 = vmatprep.subr.mxu0 0.0
    %1293 = vmatpush1.msra.mxu0 %v37
    %1294 = vmatprep.subr.mxu0 0.0
    %1295 = vmatpush1.msra.mxu0 %v38
    %1296 = vmatprep.subr.mxu0 0.0
    %1297 = vmatpush1.msra.mxu0 %v39
    %1298 = vmatprep.subr.mxu0 0.0
    %1299 = vmatpush1.msra.mxu0 %v40
    %1300 = vmatprep.subr.mxu0 0.0
    %1301 = vmatpush1.msra.mxu0 %v41
    %1302 = vmatprep.subr.mxu0 0.0
    %1303 = vmatpush1.msra.mxu0 %v42
    %1304 = vmatprep.subr.mxu0 0.0
    %1305 = vmatpush1.msra.mxu0 %v43
    %1306 = vmatprep.subr.mxu0 0.0
    %1307 = vmatpush1.msra.mxu0 %v44
    %1308 = vmatprep.subr.mxu0 0.0
    %1309 = vmatpush1.msra.mxu0 %v45
    %1310 = vmatprep.subr.mxu0 0.0
    %1311 = vmatpush1.msra.mxu0 %v46
    %1312 = vmatprep.subr.mxu0 0.0
    %1313 = vmatpush1.msra.mxu0 %v47
    %1314 = vmatprep.subr.mxu0 0.0
    %1315 = vmatpush1.msra.mxu0 0.0
    %1316 = vmatprep.subr.mxu0 0.0
    %1317 = vmatpush1.msra.mxu0 0.0
    %1318 = vmatprep.subr.mxu0 0.0
    %1319 = vmatpush1.msra.mxu0 0.0
    %1320 = vmatprep.subr.mxu0 0.0
    %1321 = vmatpush1.msra.mxu0 0.0
    %1322 = vmatprep.subr.mxu0 0.0
    %1323 = vmatpush1.msra.mxu0 0.0
    %1324 = vmatprep.subr.mxu0 0.0
    %1325 = vmatpush1.msra.mxu0 0.0
    %1326 = vmatprep.subr.mxu0 0.0
    %1327 = vmatpush1.msra.mxu0 0.0
    %1328 = vmatprep.subr.mxu0 0.0
    %1329 = vmatpush1.msra.mxu0 0.0
    %1330 = vmatprep.subr.mxu0 0.0
    %1331 = vmatpush1.msra.mxu0 0.0
    %1332 = vmatprep.subr.mxu0 0.0
    %1333 = vmatpush1.msra.mxu0 0.0
    %1334 = vmatprep.subr.mxu0 0.0
    %1335 = vmatpush1.msra.mxu0 0.0
    %1336 = vmatprep.subr.mxu0 0.0
    %1337 = vmatpush1.msra.mxu0 0.0
    %1338 = vmatprep.subr.mxu0 0.0
    %1339 = vmatpush1.msra.mxu0 0.0
    %1340 = vmatprep.subr.mxu0 0.0
    %1341 = vmatpush1.msra.mxu0 0.0
    %1342 = vmatprep.subr.mxu0 0.0
    %1343 = vmatpush1.msra.mxu0 0.0
    %1344 = vmatprep.subr.mxu0 0.0
    %1345 = vmatpush1.msra.mxu0 0.0
    %1346 = vmatprep.mubr.f32.mxu0 0.0
    %1347 = vmatmul.mubr.f32.gmra.mrb[0].mxu0 %v1280
    %v1348 = vpop.f32.mrb[0].mxu0
    %v1349 = vadd.f32 0.0, %v1348
    %v1350 = vpop.f32.mrb[0].mxu0
    %1351 = vdwg.mxu0
    %v1353 = vrot.slane %v1349, 2
    %v1355 = vadd.f32 %v773, %v1353
    %v1356 = vmax.f32 %v1355, 0.0
    %s1357 = sadd.s32 0, 6
    %p1358 = scmp.lt.s32.totalorder %s1357, %s31
    %s1359 = scalar_select %p1358, 1, 0
    %v1360 = vstv %s1359
    %vm1361 = vcmp.eq.s32.totalorder %v1360, 1
    %v1362 = vrot.slane %v1278, 7
    %v1364 = vsel %vm1361, %v1356, %v1362
    %v1366 = vrot.slane %v1364, 6
    %1368 = vmatprep.subr.mxu0 0.0
    %1369 = vmatpush1.msra.mxu0 %v32
    %1370 = vmatprep.subr.mxu0 0.0
    %1371 = vmatpush1.msra.mxu0 %v33
    %1372 = vmatprep.subr.mxu0 0.0
    %1373 = vmatpush1.msra.mxu0 %v34
    %1374 = vmatprep.subr.mxu0 0.0
    %1375 = vmatpush1.msra.mxu0 %v35
    %1376 = vmatprep.subr.mxu0 0.0
    %1377 = vmatpush1.msra.mxu0 %v36
    %1378 = vmatprep.subr.mxu0 0.0
    %1379 = vmatpush1.msra.mxu0 %v37
    %1380 = vmatprep.subr.mxu0 0.0
    %1381 = vmatpush1.msra.mxu0 %v38
    %1382 = vmatprep.subr.mxu0 0.0
    %1383 = vmatpush1.msra.mxu0 %v39
    %1384 = vmatprep.subr.mxu0 0.0
    %1385 = vmatpush1.msra.mxu0 %v40
    %1386 = vmatprep.subr.mxu0 0.0
    %1387 = vmatpush1.msra.mxu0 %v41
    %1388 = vmatprep.subr.mxu0 0.0
    %1389 = vmatpush1.msra.mxu0 %v42
    %1390 = vmatprep.subr.mxu0 0.0
    %1391 = vmatpush1.msra.mxu0 %v43
    %1392 = vmatprep.subr.mxu0 0.0
    %1393 = vmatpush1.msra.mxu0 %v44
    %1394 = vmatprep.subr.mxu0 0.0
    %1395 = vmatpush1.msra.mxu0 %v45
    %1396 = vmatprep.subr.mxu0 0.0
    %1397 = vmatpush1.msra.mxu0 %v46
    %1398 = vmatprep.subr.mxu0 0.0
    %1399 = vmatpush1.msra.mxu0 %v47
    %1400 = vmatprep.subr.mxu0 0.0
    %1401 = vmatpush1.msra.mxu0 0.0
    %1402 = vmatprep.subr.mxu0 0.0
    %1403 = vmatpush1.msra.mxu0 0.0
    %1404 = vmatprep.subr.mxu0 0.0
    %1405 = vmatpush1.msra.mxu0 0.0
    %1406 = vmatprep.subr.mxu0 0.0
    %1407 = vmatpush1.msra.mxu0 0.0
    %1408 = vmatprep.subr.mxu0 0.0
    %1409 = vmatpush1.msra.mxu0 0.0
    %1410 = vmatprep.subr.mxu0 0.0
    %1411 = vmatpush1.msra.mxu0 0.0
    %1412 = vmatprep.subr.mxu0 0.0
    %1413 = vmatpush1.msra.mxu0 0.0
    %1414 = vmatprep.subr.mxu0 0.0
    %1415 = vmatpush1.msra.mxu0 0.0
    %1416 = vmatprep.subr.mxu0 0.0
    %1417 = vmatpush1.msra.mxu0 0.0
    %1418 = vmatprep.subr.mxu0 0.0
    %1419 = vmatpush1.msra.mxu0 0.0
    %1420 = vmatprep.subr.mxu0 0.0
    %1421 = vmatpush1.msra.mxu0 0.0
    %1422 = vmatprep.subr.mxu0 0.0
    %1423 = vmatpush1.msra.mxu0 0.0
    %1424 = vmatprep.subr.mxu0 0.0
    %1425 = vmatpush1.msra.mxu0 0.0
    %1426 = vmatprep.subr.mxu0 0.0
    %1427 = vmatpush1.msra.mxu0 0.0
    %1428 = vmatprep.subr.mxu0 0.0
    %1429 = vmatpush1.msra.mxu0 0.0
    %1430 = vmatprep.subr.mxu0 0.0
    %1431 = vmatpush1.msra.mxu0 0.0
    %1432 = vmatprep.mubr.f32.mxu0 0.0
    %1433 = vmatmul.mubr.f32.gmra.mrb[0].mxu0 %v1366
    %v1434 = vpop.f32.mrb[0].mxu0
    %v1435 = vadd.f32 0.0, %v1434
    %v1436 = vpop.f32.mrb[0].mxu0
    %1437 = vdwg.mxu0
    %v1439 = vrot.slane %v1435, 1
    %v1441 = vadd.f32 %v773, %v1439
    %v1442 = vmax.f32 %v1441, 0.0
    %s1443 = sadd.s32 0, 7
    %p1444 = scmp.lt.s32.totalorder %s1443, %s31
    %s1445 = scalar_select %p1444, 1, 0
    %v1446 = vstv %s1445
    %vm1447 = vcmp.eq.s32.totalorder %v1446, 1
    %v1448 = vrot.slane %v1364, 7
    %v1450 = vsel %vm1447, %v1442, %v1448
    %vm1451 = vcmask 1040384
    %v1452 = vsel %vm1451, %v850, %v934
    %vm1453 = vcmask 1041408
    %v1454 = vsel %vm1453, %v1452, %v1020
    %vm1455 = vcmask 1042432
    %v1456 = vsel %vm1455, %v1454, %v1106
    %vm1457 = vcmask 1043456
    %v1458 = vsel %vm1457, %v1456, %v1192
    %vm1459 = vcmask 1044480
    %v1460 = vsel %vm1459, %v1458, %v1278
    %vm1461 = vcmask 1045504
    %v1462 = vsel %vm1461, %v1460, %v1364
    %vm1463 = vcmask 1046528
    %v1464 = vsel %vm1463, %v1462, %v1450
    %1465 = vst [vmem:[#allocation3] sm:$0xff] %v1464
    %1466 = vst [vmem:[%s7 - $0x7] sm:$0x80] %v1450
  $region37: #{two_feature_rnn_forward.1} parent=0 // pred_fallthru
    _
  %v1467 = vld [vmem:[#allocation3] sm:$0xff]
  %v1468 = vld [vmem:[%s4] sm:$0xff]
  %v1469 = vld [vmem:[%s4 + $0x8] sm:$0xff]
  %v1470 = vld [vmem:[%s4 + $0x10] sm:$0xff]
  %v1471 = vld [vmem:[%s4 + $0x18] sm:$0xff]
  %v1472 = vld [vmem:[%s4 + $0x20] sm:$0xff]
  %v1473 = vld [vmem:[%s4 + $0x28] sm:$0xff]
  %v1474 = vld [vmem:[%s4 + $0x30] sm:$0xff]
  %v1475 = vld [vmem:[%s4 + $0x38] sm:$0xff]
  %v1476 = vld [vmem:[%s4 + $0x40] sm:$0xff]
  %v1477 = vld [vmem:[%s4 + $0x48] sm:$0xff]
  %v1478 = vld [vmem:[%s4 + $0x50] sm:$0xff]
  %v1479 = vld [vmem:[%s4 + $0x58] sm:$0xff]
  %v1480 = vld [vmem:[%s4 + $0x60] sm:$0xff]
  %v1481 = vld [vmem:[%s4 + $0x68] sm:$0xff]
  %v1482 = vld [vmem:[%s4 + $0x70] sm:$0xff]
  %v1483 = vld [vmem:[%s4 + $0x78] sm:$0xff]
  %v1484 = vld [vmem:[%s5] sm:$0x1]
  %v1486 = vlaneseq
  %v1487 = vshrl.u32 %v1486, 7
  %v1488 = vsub.s32 0, %v1487
  %v1489 = vrot.slane %v1484, %v1488
  %1491 = vmatprep.subr.mxu0 0.0
  %1492 = vmatpush1.msra.mxu0 %v1468
  %1493 = vmatprep.subr.mxu0 0.0
  %1494 = vmatpush1.msra.mxu0 %v1469
  %1495 = vmatprep.subr.mxu0 0.0
  %1496 = vmatpush1.msra.mxu0 %v1470
  %1497 = vmatprep.subr.mxu0 0.0
  %1498 = vmatpush1.msra.mxu0 %v1471
  %1499 = vmatprep.subr.mxu0 0.0
  %1500 = vmatpush1.msra.mxu0 %v1472
  %1501 = vmatprep.subr.mxu0 0.0
  %1502 = vmatpush1.msra.mxu0 %v1473
  %1503 = vmatprep.subr.mxu0 0.0
  %1504 = vmatpush1.msra.mxu0 %v1474
  %1505 = vmatprep.subr.mxu0 0.0
  %1506 = vmatpush1.msra.mxu0 %v1475
  %1507 = vmatprep.subr.mxu0 0.0
  %1508 = vmatpush1.msra.mxu0 %v1476
  %1509 = vmatprep.subr.mxu0 0.0
  %1510 = vmatpush1.msra.mxu0 %v1477
  %1511 = vmatprep.subr.mxu0 0.0
  %1512 = vmatpush1.msra.mxu0 %v1478
  %1513 = vmatprep.subr.mxu0 0.0
  %1514 = vmatpush1.msra.mxu0 %v1479
  %1515 = vmatprep.subr.mxu0 0.0
  %1516 = vmatpush1.msra.mxu0 %v1480
  %1517 = vmatprep.subr.mxu0 0.0
  %1518 = vmatpush1.msra.mxu0 %v1481
  %1519 = vmatprep.subr.mxu0 0.0
  %1520 = vmatpush1.msra.mxu0 %v1482
  %1521 = vmatprep.subr.mxu0 0.0
  %1522 = vmatpush1.msra.mxu0 %v1483
  %1523 = vmatprep.subr.mxu0 0.0
  %1524 = vmatpush1.msra.mxu0 0.0
  %1525 = vmatprep.subr.mxu0 0.0
  %1526 = vmatpush1.msra.mxu0 0.0
  %1527 = vmatprep.subr.mxu0 0.0
  %1528 = vmatpush1.msra.mxu0 0.0
  %1529 = vmatprep.subr.mxu0 0.0
  %1530 = vmatpush1.msra.mxu0 0.0
  %1531 = vmatprep.subr.mxu0 0.0
  %1532 = vmatpush1.msra.mxu0 0.0
  %1533 = vmatprep.subr.mxu0 0.0
  %1534 = vmatpush1.msra.mxu0 0.0
  %1535 = vmatprep.subr.mxu0 0.0
  %1536 = vmatpush1.msra.mxu0 0.0
  %1537 = vmatprep.subr.mxu0 0.0
  %1538 = vmatpush1.msra.mxu0 0.0
  %1539 = vmatprep.subr.mxu0 0.0
  %1540 = vmatpush1.msra.mxu0 0.0
  %1541 = vmatprep.subr.mxu0 0.0
  %1542 = vmatpush1.msra.mxu0 0.0
  %1543 = vmatprep.subr.mxu0 0.0
  %1544 = vmatpush1.msra.mxu0 0.0
  %1545 = vmatprep.subr.mxu0 0.0
  %1546 = vmatpush1.msra.mxu0 0.0
  %1547 = vmatprep.subr.mxu0 0.0
  %1548 = vmatpush1.msra.mxu0 0.0
  %1549 = vmatprep.subr.mxu0 0.0
  %1550 = vmatpush1.msra.mxu0 0.0
  %1551 = vmatprep.subr.mxu0 0.0
  %1552 = vmatpush1.msra.mxu0 0.0
  %1553 = vmatprep.subr.mxu0 0.0
  %1554 = vmatpush1.msra.mxu0 0.0
  %1555 = vmatprep.mubr.f32.mxu0 0.0
  %1556 = vmatmul.mubr.f32.gmra.mrb[0].mxu0 %v1467
  %v1557 = vpop.f32.mrb[0].mxu0
  %v1558 = vadd.f32 %v1489, %v1557
  %v1559 = vpop.f32.mrb[0].mxu0
  %1560 = vdwg.mxu0
  %1561 = vst [vmem:[%s6] sm:$0xff] %v1558
  // Predicated region
  $region38: #{two_feature_rnn_forward.1} parent=0 // pred_check
    _
  $region39: #{two_feature_rnn_forward.1} parent=0 // pred_check_branch
    %1563 = sbr.rel (0) target = $region41
  $region40: #{two_feature_rnn_forward.1} parent=0 // pred_region
    _
  $region41: #{two_feature_rnn_forward.1} parent=0 // pred_fallthru
    _
  // Predicated region
  $region42: #{two_feature_rnn_forward.1} parent=0 // pred_check
    _
  $region43: #{two_feature_rnn_forward.1} parent=0 // pred_check_branch
    %1565 = sbr.rel (0) target = $region45
  $region44: #{two_feature_rnn_forward.1} parent=0 // pred_region
    _
  $region45: #{two_feature_rnn_forward.1} parent=0 // pred_fallthru
    _
  // Predicated region
  $region46: #{two_feature_rnn_forward.1} parent=0 // pred_check
    _
  $region47: #{two_feature_rnn_forward.1} parent=0 // pred_check_branch
    %1567 = sbr.rel (0) target = $region49
  $region48: #{two_feature_rnn_forward.1} parent=0 // pred_region
    _
  $region49: #{two_feature_rnn_forward.1} parent=0 // pred_fallthru
    _
  // Predicated region
  $region50: #{two_feature_rnn_forward.1} parent=0 // pred_check
    _
  $region51: #{two_feature_rnn_forward.1} parent=0 // pred_check_branch
    %1569 = sbr.rel (0) target = $region53
  $region52: #{two_feature_rnn_forward.1} parent=0 // pred_region
    _
  $region53: #{two_feature_rnn_forward.1} parent=0 // pred_fallthru
    _

</llo_original>
